<compile_context>
chip_gen: v5e
topology: v5e:2x2
jax: 0.10.0
libtpu: 0.0.40
codegen_flags: <defaults>
</compile_context>

<pallas_src>
import functools

import jax
import jax.numpy as jnp
from jax import lax
from jax.experimental import pallas as pl
from jax.experimental.pallas import tpu as pltpu

NEG = -1e30   # finite "-inf": NEG - NEG == 0 and exp(NEG - finite) == 0, no NaNs
BBLK = 8      # samples per grid step = sublanes of one f32 vreg


def _ctc_kernel(targets_ref, preds_ref, loss_ref, pext_ref, *, S, L, LP):
    """CTC negative log-likelihood for BBLK samples at once (log-space alpha)."""
    _, T, C = preds_ref.shape

    # ---- log_softmax over classes (lane axis), all BBLK samples at once ----
    logits = preds_ref[...].astype(jnp.float32)                        # (BBLK, T, C)
    mx = jnp.max(logits, axis=-1, keepdims=True)
    lse = mx + jnp.log(jnp.sum(jnp.exp(logits - mx), axis=-1, keepdims=True))
    logp = logits - lse                                                # (BBLK, T, C)

    lane = lax.broadcasted_iota(jnp.int32, (BBLK, LP), 1)              # (BBLK, LP)

    # ---- extended labels, vectorized: ext[b, 2s+1] = targets[b, s], else 0 ----
    s_row = lax.broadcasted_iota(jnp.int32, (S, LP), 0)
    l_col = lax.broadcasted_iota(jnp.int32, (S, LP), 1)
    sel = (l_col == 2 * s_row + 1).astype(jnp.float32)                 # (S, LP)
    tgt_f = targets_ref[...].astype(jnp.float32)                       # (BBLK, S)
    ext = jnp.dot(tgt_f, sel, preferred_element_type=jnp.float32).astype(jnp.int32)

    # ---- skip mask: odd lane, 3 <= l < L, ext[b, l] != ext[b, l-2] ----
    ext_m2 = pltpu.roll(ext, shift=2, axis=1)                          # ext[b, l-2]
    skip = ((lane & 1) == 1) & (lane >= 3) & (lane < L) & (ext != ext_m2)

    # ---- p_ext[b, t, l] = logp[b, t, ext[b, l]] via per-sample one-hot dots ----
    c_col = lax.broadcasted_iota(jnp.int32, (C, LP), 0)                # (C, LP)
    lane_tl = lax.broadcasted_iota(jnp.int32, (T, LP), 1)
    valid_tl = lane_tl < L
    for b in range(BBLK):
        onehot_b = (c_col == ext[b:b + 1, :]).astype(jnp.float32)      # (C, LP)
        pb = jnp.dot(logp[b], onehot_b, preferred_element_type=jnp.float32)  # (T, LP)
        pext_ref[pl.ds(b * T, T), :] = jnp.where(valid_tl, pb, NEG)    # rows b*T .. b*T+T-1

    # ---- alpha recursion (serial over T): XLU rolls + VPU/EUP only, no MXU ----
    valid = lane < L
    pt0 = pext_ref[pl.ds(0, BBLK, stride=T), :]                        # (BBLK, LP): t = 0
    alpha = jnp.where(lane < 2, pt0, NEG)

    for t in range(1, T):                                              # fully unrolled
        p1 = jnp.where(lane >= 1, pltpu.roll(alpha, shift=1, axis=1), NEG)  # alpha[l-1]
        p2 = jnp.where(skip, pltpu.roll(alpha, shift=2, axis=1), NEG)       # alpha[l-2]
        m = jnp.maximum(jnp.maximum(alpha, p1), p2)
        acc = m + jnp.log(jnp.exp(alpha - m) + jnp.exp(p1 - m) + jnp.exp(p2 - m))
        pt = pext_ref[pl.ds(t, BBLK, stride=T), :]                     # rows b*T + t
        alpha = jnp.where(valid, pt + acc, NEG)

    # ---- loss_b = -logsumexp(alpha[L-1], alpha[L-2]) ----
    tail = jnp.where((lane == L - 1) | (lane == L - 2), alpha, NEG)
    mt = jnp.max(tail, axis=1, keepdims=True)                          # (BBLK, 1)
    loss_ref[...] = -(mt + jnp.log(jnp.sum(jnp.exp(tail - mt), axis=1, keepdims=True)))


def captcha_loss(preds, targets):
    """Matches torch CaptchaLoss.forward: CTCLoss(blank=0, reduction='mean')."""
    B, T, C = preds.shape
    S = targets.shape[1]
    L = 2 * S + 1
    LP = 128
    assert L <= LP, "padded extended-label axis must fit in one vreg row"
    # TODO(synk): torch CTCLoss returns +inf for infeasible alignments (T < 2S+1);
    # the finite NEG floor makes that a huge finite loss instead.

    b_pad = pl.cdiv(B, BBLK) * BBLK
    preds_p = preds
    targets_p = targets.astype(jnp.int32)
    if b_pad != B:                       # pad batch to a multiple of BBLK with dummies
        preds_p = jnp.pad(preds_p, ((0, b_pad - B), (0, 0), (0, 0)))
        targets_p = jnp.pad(targets_p, ((0, b_pad - B), (0, 0)), constant_values=1)

    kernel = functools.partial(_ctc_kernel, S=S, L=L, LP=LP)
    per_sample = pl.pallas_call(
        kernel,
        out_shape=jax.ShapeDtypeStruct((b_pad, 1), jnp.float32),
        grid=(b_pad // BBLK,),
        in_specs=[
            pl.BlockSpec((BBLK, S), lambda i: (i, 0)),        # targets (VMEM, int32)
            pl.BlockSpec((BBLK, T, C), lambda i: (i, 0, 0)),  # preds
        ],
        out_specs=pl.BlockSpec((BBLK, 1), lambda i: (i, 0)),  # non-resident per-block out
        scratch_shapes=[pltpu.VMEM((BBLK * T, LP), jnp.float32)],   # pext, sample-major
        compiler_params=pltpu.CompilerParams(
            dimension_semantics=("parallel",),                # lets v7x split batch on 2 TCs
        ),
    )(targets_p, preds_p)

    # reduction='mean': divide each loss by its target length, then batch mean.
    return jnp.mean(per_sample[:B, 0] / jnp.float32(S))


def captcha_loss_ref(preds, targets):
    """Pure-JAX reference (same semantics as torch.nn.CTCLoss(blank=0))."""
    B, T, C = preds.shape
    S = targets.shape[1]
    L = 2 * S + 1
    logp = jax.nn.log_softmax(preds.astype(jnp.float32), axis=-1)
    neg = NEG

    def one(logp_b, tgt_b):
        ext = jnp.zeros((L,), jnp.int32).at[1::2].set(tgt_b)
        pext = logp_b[:, ext]                                          # (T, L)
        skip = jnp.zeros((L,), bool).at[3::2].set(tgt_b[1:] != tgt_b[:-1])
        alpha = jnp.full((L,), neg, jnp.float32)
        alpha = alpha.at[0].set(pext[0, 0]).at[1].set(pext[0, 1])

        def step(a, p_t):
            p1 = jnp.concatenate([jnp.full((1,), neg, jnp.float32), a[:-1]])
            p2 = jnp.concatenate([jnp.full((2,), neg, jnp.float32), a[:-2]])
            p2 = jnp.where(skip, p2, neg)
            m = jnp.maximum(jnp.maximum(a, p1), p2)
            acc = m + jnp.log(jnp.exp(a - m) + jnp.exp(p1 - m) + jnp.exp(p2 - m))
            return p_t + acc, None

        alpha, _ = lax.scan(step, alpha, pext[1:])
        tail = alpha[L - 2:L]
        m = jnp.max(tail)
        return -(m + jnp.log(jnp.sum(jnp.exp(tail - m))))

    losses = jax.vmap(one)(logp, targets)
    return jnp.mean(losses / S)


if __name__ == "__main__":
    # B deliberately not a multiple of BBLK to exercise the padding path;
    # b_pad = 16 -> 2 grid steps of 8 samples each.
    B, T, C, S = 12, 16, 32, 8
    key = jax.random.PRNGKey(0)
    kp, kt = jax.random.split(key)
    preds = jax.random.normal(kp, (B, T, C), dtype=jnp.float32)
    # labels in [1, C-1]; 0 is the CTC blank
    targets = jax.random.randint(kt, (B, S), 1, C, dtype=jnp.int32)

    loss = jax.block_until_ready(captcha_loss(preds, targets))
    ref = jax.block_until_ready(captcha_loss_ref(preds, targets))

    assert jnp.isfinite(loss), f"non-finite loss: {loss}"
    assert jnp.allclose(loss, ref, rtol=1e-4, atol=1e-4), (loss, ref)
    print("KERNEL_OK")
</pallas_src>

<mosaic_0001>
module attributes {stable_mosaic.version = 11 : i64} {
  func.func @_ctc_kernel(%arg0: i32, %arg1: memref<8x8xi32, #tpu.memory_space<vmem>>, %arg2: memref<8x16x32xf32, #tpu.memory_space<vmem>>, %arg3: memref<8x1xf32, #tpu.memory_space<vmem>>, %arg4: memref<128x128xf32, #tpu.memory_space<vmem>>) attributes {dimension_semantics = [#tpu.dimension_semantics<parallel>], iteration_bounds = array<i64: 2>, scalar_prefetch = 0 : i64, scratch_operands = 1 : i64, tpu.core_type = #tpu.core_type<tc>, window_params = [{transform_indices = @transform_0, window_bounds = array<i64: 8, 8>}, {transform_indices = @transform_1, window_bounds = array<i64: 8, 16, 32>}, {transform_indices = @transform_2, window_bounds = array<i64: 8, 1>}]} {
    %c0 = arith.constant 0 : index
    %c0_0 = arith.constant 0 : index
    %c0_1 = arith.constant 0 : index
    %0 = vector.load %arg2[%c0, %c0_0, %c0_1] : memref<8x16x32xf32, #tpu.memory_space<vmem>>, vector<8x16x32xf32>
    %cst = arith.constant dense<0xFF800000> : vector<8x16xf32>
    %1 = vector.multi_reduction <maximumf>, %0, %cst [2] : vector<8x16x32xf32> to vector<8x16xf32>
    %2 = vector.shape_cast %1 : vector<8x16xf32> to vector<8x16x1xf32>
    %3 = vector.broadcast %2 : vector<8x16x1xf32> to vector<8x16x32xf32>
    %4 = arith.subf %0, %3 : vector<8x16x32xf32>
    %5 = math.exp %4 : vector<8x16x32xf32>
    %cst_2 = arith.constant dense<0.000000e+00> : vector<8x16xf32>
    %6 = vector.multi_reduction <add>, %5, %cst_2 [2] : vector<8x16x32xf32> to vector<8x16xf32>
    %7 = vector.shape_cast %6 : vector<8x16xf32> to vector<8x16x1xf32>
    %8 = math.log %7 : vector<8x16x1xf32>
    %9 = arith.addf %2, %8 : vector<8x16x1xf32>
    %10 = vector.broadcast %9 : vector<8x16x1xf32> to vector<8x16x32xf32>
    %11 = arith.subf %0, %10 : vector<8x16x32xf32>
    %12 = tpu.iota {dimensions = array<i32: 1>} : vector<8x128xi32>
    %13 = tpu.iota {dimensions = array<i32: 0>} : vector<8x128xi32>
    %14 = tpu.iota {dimensions = array<i32: 1>} : vector<8x128xi32>
    %c2_i32 = arith.constant 2 : i32
    %15 = vector.broadcast %c2_i32 : i32 to vector<8x128xi32>
    %16 = arith.muli %15, %13 : vector<8x128xi32>
    %c1_i32 = arith.constant 1 : i32
    %17 = vector.broadcast %c1_i32 : i32 to vector<8x128xi32>
    %18 = arith.addi %16, %17 : vector<8x128xi32>
    %19 = arith.cmpi eq, %14, %18 : vector<8x128xi32>
    %20 = arith.extui %19 : vector<8x128xi1> to vector<8x128xi32>
    %21 = arith.sitofp %20 : vector<8x128xi32> to vector<8x128xf32>
    %c0_3 = arith.constant 0 : index
    %c0_4 = arith.constant 0 : index
    %22 = vector.load %arg1[%c0_3, %c0_4] : memref<8x8xi32, #tpu.memory_space<vmem>>, vector<8x8xi32>
    %23 = arith.sitofp %22 : vector<8x8xi32> to vector<8x8xf32>
    %cst_5 = arith.constant dense<0.000000e+00> : vector<8x128xf32>
    %24 = tpu.matmul %23, %21, %cst_5 {dimension_numbers = #tpu.dot_dimension_numbers<[1], [0], [0], [1], [0, 0, 1, 1], [], []>} : vector<8x8xf32>, vector<8x128xf32>, vector<8x128xf32> -> vector<8x128xf32>
    %25 = arith.fptosi %24 : vector<8x128xf32> to vector<8x128xi32>
    %c2_i32_6 = arith.constant 2 : i32
    %26 = tpu.dynamic_rotate %25 by %c2_i32_6 dim 1 : vector<8x128xi32>, i32 -> vector<8x128xi32>
    %c1_i32_7 = arith.constant 1 : i32
    %27 = vector.broadcast %c1_i32_7 : i32 to vector<8x128xi32>
    %28 = arith.andi %12, %27 : vector<8x128xi32>
    %c1_i32_8 = arith.constant 1 : i32
    %29 = vector.broadcast %c1_i32_8 : i32 to vector<8x128xi32>
    %30 = arith.cmpi eq, %28, %29 : vector<8x128xi32>
    %c3_i32 = arith.constant 3 : i32
    %31 = vector.broadcast %c3_i32 : i32 to vector<8x128xi32>
    %32 = arith.cmpi sge, %12, %31 : vector<8x128xi32>
    %33 = arith.andi %30, %32 : vector<8x128xi1>
    %c17_i32 = arith.constant 17 : i32
    %34 = vector.broadcast %c17_i32 : i32 to vector<8x128xi32>
    %35 = arith.cmpi slt, %12, %34 : vector<8x128xi32>
    %36 = arith.andi %33, %35 : vector<8x128xi1>
    %37 = arith.cmpi ne, %25, %26 : vector<8x128xi32>
    %38 = arith.andi %36, %37 : vector<8x128xi1>
    %39 = tpu.iota {dimensions = array<i32: 0>} : vector<32x128xi32>
    %40 = tpu.iota {dimensions = array<i32: 1>} : vector<16x128xi32>
    %c17_i32_9 = arith.constant 17 : i32
    %41 = vector.broadcast %c17_i32_9 : i32 to vector<16x128xi32>
    %42 = arith.cmpi slt, %40, %41 : vector<16x128xi32>
    %43 = vector.extract_strided_slice %25 {offsets = [0, 0], sizes = [1, 128], strides = [1, 1]} : vector<8x128xi32> to vector<1x128xi32>
    %44 = vector.broadcast %43 : vector<1x128xi32> to vector<32x128xi32>
    %45 = arith.cmpi eq, %39, %44 : vector<32x128xi32>
    %46 = arith.extui %45 : vector<32x128xi1> to vector<32x128xi32>
    %47 = arith.sitofp %46 : vector<32x128xi32> to vector<32x128xf32>
    %48 = vector.extract_strided_slice %11 {offsets = [0, 0, 0], sizes = [1, 16, 32], strides = [1, 1, 1]} : vector<8x16x32xf32> to vector<1x16x32xf32>
    %49 = vector.shape_cast %48 : vector<1x16x32xf32> to vector<16x32xf32>
    %cst_10 = arith.constant dense<0.000000e+00> : vector<16x128xf32>
    %50 = tpu.matmul %49, %47, %cst_10 {dimension_numbers = #tpu.dot_dimension_numbers<[1], [0], [0], [1], [0, 0, 1, 1], [], []>} : vector<16x32xf32>, vector<32x128xf32>, vector<16x128xf32> -> vector<16x128xf32>
    %cst_11 = arith.constant -1.000000e+30 : f32
    %51 = vector.broadcast %cst_11 : f32 to vector<16x128xf32>
    %52 = arith.select %42, %50, %51 : vector<16x128xi1>, vector<16x128xf32>
    %c0_12 = arith.constant 0 : index
    %c0_13 = arith.constant 0 : index
    %53 = vector.load %arg4[%c0_12, %c0_13] : memref<128x128xf32, #tpu.memory_space<vmem>>, vector<16x128xf32>
    tpu.vector_store %arg4[%c0_12, %c0_13], %52 {strides = array<i32>} : memref<128x128xf32, #tpu.memory_space<vmem>>, vector<16x128xf32>,
    %54 = vector.extract_strided_slice %25 {offsets = [1, 0], sizes = [1, 128], strides = [1, 1]} : vector<8x128xi32> to vector<1x128xi32>
    %55 = vector.broadcast %54 : vector<1x128xi32> to vector<32x128xi32>
    %56 = arith.cmpi eq, %39, %55 : vector<32x128xi32>
    %57 = arith.extui %56 : vector<32x128xi1> to vector<32x128xi32>
    %58 = arith.sitofp %57 : vector<32x128xi32> to vector<32x128xf32>
    %59 = vector.extract_strided_slice %11 {offsets = [1, 0, 0], sizes = [1, 16, 32], strides = [1, 1, 1]} : vector<8x16x32xf32> to vector<1x16x32xf32>
    %60 = vector.shape_cast %59 : vector<1x16x32xf32> to vector<16x32xf32>
    %cst_14 = arith.constant dense<0.000000e+00> : vector<16x128xf32>
    %61 = tpu.matmul %60, %58, %cst_14 {dimension_numbers = #tpu.dot_dimension_numbers<[1], [0], [0], [1], [0, 0, 1, 1], [], []>} : vector<16x32xf32>, vector<32x128xf32>, vector<16x128xf32> -> vector<16x128xf32>
    %cst_15 = arith.constant -1.000000e+30 : f32
    %62 = vector.broadcast %cst_15 : f32 to vector<16x128xf32>
    %63 = arith.select %42, %61, %62 : vector<16x128xi1>, vector<16x128xf32>
    %c16 = arith.constant 16 : index
    %c0_16 = arith.constant 0 : index
    %64 = vector.load %arg4[%c16, %c0_16] : memref<128x128xf32, #tpu.memory_space<vmem>>, vector<16x128xf32>
    tpu.vector_store %arg4[%c16, %c0_16], %63 {strides = array<i32>} : memref<128x128xf32, #tpu.memory_space<vmem>>, vector<16x128xf32>,
    %65 = vector.extract_strided_slice %25 {offsets = [2, 0], sizes = [1, 128], strides = [1, 1]} : vector<8x128xi32> to vector<1x128xi32>
    %66 = vector.broadcast %65 : vector<1x128xi32> to vector<32x128xi32>
    %67 = arith.cmpi eq, %39, %66 : vector<32x128xi32>
    %68 = arith.extui %67 : vector<32x128xi1> to vector<32x128xi32>
    %69 = arith.sitofp %68 : vector<32x128xi32> to vector<32x128xf32>
    %70 = vector.extract_strided_slice %11 {offsets = [2, 0, 0], sizes = [1, 16, 32], strides = [1, 1, 1]} : vector<8x16x32xf32> to vector<1x16x32xf32>
    %71 = vector.shape_cast %70 : vector<1x16x32xf32> to vector<16x32xf32>
    %cst_17 = arith.constant dense<0.000000e+00> : vector<16x128xf32>
    %72 = tpu.matmul %71, %69, %cst_17 {dimension_numbers = #tpu.dot_dimension_numbers<[1], [0], [0], [1], [0, 0, 1, 1], [], []>} : vector<16x32xf32>, vector<32x128xf32>, vector<16x128xf32> -> vector<16x128xf32>
    %cst_18 = arith.constant -1.000000e+30 : f32
    %73 = vector.broadcast %cst_18 : f32 to vector<16x128xf32>
    %74 = arith.select %42, %72, %73 : vector<16x128xi1>, vector<16x128xf32>
    %c32 = arith.constant 32 : index
    %c0_19 = arith.constant 0 : index
    %75 = vector.load %arg4[%c32, %c0_19] : memref<128x128xf32, #tpu.memory_space<vmem>>, vector<16x128xf32>
    tpu.vector_store %arg4[%c32, %c0_19], %74 {strides = array<i32>} : memref<128x128xf32, #tpu.memory_space<vmem>>, vector<16x128xf32>,
    %76 = vector.extract_strided_slice %25 {offsets = [3, 0], sizes = [1, 128], strides = [1, 1]} : vector<8x128xi32> to vector<1x128xi32>
    %77 = vector.broadcast %76 : vector<1x128xi32> to vector<32x128xi32>
    %78 = arith.cmpi eq, %39, %77 : vector<32x128xi32>
    %79 = arith.extui %78 : vector<32x128xi1> to vector<32x128xi32>
    %80 = arith.sitofp %79 : vector<32x128xi32> to vector<32x128xf32>
    %81 = vector.extract_strided_slice %11 {offsets = [3, 0, 0], sizes = [1, 16, 32], strides = [1, 1, 1]} : vector<8x16x32xf32> to vector<1x16x32xf32>
    %82 = vector.shape_cast %81 : vector<1x16x32xf32> to vector<16x32xf32>
    %cst_20 = arith.constant dense<0.000000e+00> : vector<16x128xf32>
    %83 = tpu.matmul %82, %80, %cst_20 {dimension_numbers = #tpu.dot_dimension_numbers<[1], [0], [0], [1], [0, 0, 1, 1], [], []>} : vector<16x32xf32>, vector<32x128xf32>, vector<16x128xf32> -> vector<16x128xf32>
    %cst_21 = arith.constant -1.000000e+30 : f32
    %84 = vector.broadcast %cst_21 : f32 to vector<16x128xf32>
    %85 = arith.select %42, %83, %84 : vector<16x128xi1>, vector<16x128xf32>
    %c48 = arith.constant 48 : index
    %c0_22 = arith.constant 0 : index
    %86 = vector.load %arg4[%c48, %c0_22] : memref<128x128xf32, #tpu.memory_space<vmem>>, vector<16x128xf32>
    tpu.vector_store %arg4[%c48, %c0_22], %85 {strides = array<i32>} : memref<128x128xf32, #tpu.memory_space<vmem>>, vector<16x128xf32>,
    %87 = vector.extract_strided_slice %25 {offsets = [4, 0], sizes = [1, 128], strides = [1, 1]} : vector<8x128xi32> to vector<1x128xi32>
    %88 = vector.broadcast %87 : vector<1x128xi32> to vector<32x128xi32>
    %89 = arith.cmpi eq, %39, %88 : vector<32x128xi32>
    %90 = arith.extui %89 : vector<32x128xi1> to vector<32x128xi32>
    %91 = arith.sitofp %90 : vector<32x128xi32> to vector<32x128xf32>
    %92 = vector.extract_strided_slice %11 {offsets = [4, 0, 0], sizes = [1, 16, 32], strides = [1, 1, 1]} : vector<8x16x32xf32> to vector<1x16x32xf32>
    %93 = vector.shape_cast %92 : vector<1x16x32xf32> to vector<16x32xf32>
    %cst_23 = arith.constant dense<0.000000e+00> : vector<16x128xf32>
    %94 = tpu.matmul %93, %91, %cst_23 {dimension_numbers = #tpu.dot_dimension_numbers<[1], [0], [0], [1], [0, 0, 1, 1], [], []>} : vector<16x32xf32>, vector<32x128xf32>, vector<16x128xf32> -> vector<16x128xf32>
    %cst_24 = arith.constant -1.000000e+30 : f32
    %95 = vector.broadcast %cst_24 : f32 to vector<16x128xf32>
    %96 = arith.select %42, %94, %95 : vector<16x128xi1>, vector<16x128xf32>
    %c64 = arith.constant 64 : index
    %c0_25 = arith.constant 0 : index
    %97 = vector.load %arg4[%c64, %c0_25] : memref<128x128xf32, #tpu.memory_space<vmem>>, vector<16x128xf32>
    tpu.vector_store %arg4[%c64, %c0_25], %96 {strides = array<i32>} : memref<128x128xf32, #tpu.memory_space<vmem>>, vector<16x128xf32>,
    %98 = vector.extract_strided_slice %25 {offsets = [5, 0], sizes = [1, 128], strides = [1, 1]} : vector<8x128xi32> to vector<1x128xi32>
    %99 = vector.broadcast %98 : vector<1x128xi32> to vector<32x128xi32>
    %100 = arith.cmpi eq, %39, %99 : vector<32x128xi32>
    %101 = arith.extui %100 : vector<32x128xi1> to vector<32x128xi32>
    %102 = arith.sitofp %101 : vector<32x128xi32> to vector<32x128xf32>
    %103 = vector.extract_strided_slice %11 {offsets = [5, 0, 0], sizes = [1, 16, 32], strides = [1, 1, 1]} : vector<8x16x32xf32> to vector<1x16x32xf32>
    %104 = vector.shape_cast %103 : vector<1x16x32xf32> to vector<16x32xf32>
    %cst_26 = arith.constant dense<0.000000e+00> : vector<16x128xf32>
    %105 = tpu.matmul %104, %102, %cst_26 {dimension_numbers = #tpu.dot_dimension_numbers<[1], [0], [0], [1], [0, 0, 1, 1], [], []>} : vector<16x32xf32>, vector<32x128xf32>, vector<16x128xf32> -> vector<16x128xf32>
    %cst_27 = arith.constant -1.000000e+30 : f32
    %106 = vector.broadcast %cst_27 : f32 to vector<16x128xf32>
    %107 = arith.select %42, %105, %106 : vector<16x128xi1>, vector<16x128xf32>
    %c80 = arith.constant 80 : index
    %c0_28 = arith.constant 0 : index
    %108 = vector.load %arg4[%c80, %c0_28] : memref<128x128xf32, #tpu.memory_space<vmem>>, vector<16x128xf32>
    tpu.vector_store %arg4[%c80, %c0_28], %107 {strides = array<i32>} : memref<128x128xf32, #tpu.memory_space<vmem>>, vector<16x128xf32>,
    %109 = vector.extract_strided_slice %25 {offsets = [6, 0], sizes = [1, 128], strides = [1, 1]} : vector<8x128xi32> to vector<1x128xi32>
    %110 = vector.broadcast %109 : vector<1x128xi32> to vector<32x128xi32>
    %111 = arith.cmpi eq, %39, %110 : vector<32x128xi32>
    %112 = arith.extui %111 : vector<32x128xi1> to vector<32x128xi32>
    %113 = arith.sitofp %112 : vector<32x128xi32> to vector<32x128xf32>
    %114 = vector.extract_strided_slice %11 {offsets = [6, 0, 0], sizes = [1, 16, 32], strides = [1, 1, 1]} : vector<8x16x32xf32> to vector<1x16x32xf32>
    %115 = vector.shape_cast %114 : vector<1x16x32xf32> to vector<16x32xf32>
    %cst_29 = arith.constant dense<0.000000e+00> : vector<16x128xf32>
    %116 = tpu.matmul %115, %113, %cst_29 {dimension_numbers = #tpu.dot_dimension_numbers<[1], [0], [0], [1], [0, 0, 1, 1], [], []>} : vector<16x32xf32>, vector<32x128xf32>, vector<16x128xf32> -> vector<16x128xf32>
    %cst_30 = arith.constant -1.000000e+30 : f32
    %117 = vector.broadcast %cst_30 : f32 to vector<16x128xf32>
    %118 = arith.select %42, %116, %117 : vector<16x128xi1>, vector<16x128xf32>
    %c96 = arith.constant 96 : index
    %c0_31 = arith.constant 0 : index
    %119 = vector.load %arg4[%c96, %c0_31] : memref<128x128xf32, #tpu.memory_space<vmem>>, vector<16x128xf32>
    tpu.vector_store %arg4[%c96, %c0_31], %118 {strides = array<i32>} : memref<128x128xf32, #tpu.memory_space<vmem>>, vector<16x128xf32>,
    %120 = vector.extract_strided_slice %25 {offsets = [7, 0], sizes = [1, 128], strides = [1, 1]} : vector<8x128xi32> to vector<1x128xi32>
    %121 = vector.broadcast %120 : vector<1x128xi32> to vector<32x128xi32>
    %122 = arith.cmpi eq, %39, %121 : vector<32x128xi32>
    %123 = arith.extui %122 : vector<32x128xi1> to vector<32x128xi32>
    %124 = arith.sitofp %123 : vector<32x128xi32> to vector<32x128xf32>
    %125 = vector.extract_strided_slice %11 {offsets = [7, 0, 0], sizes = [1, 16, 32], strides = [1, 1, 1]} : vector<8x16x32xf32> to vector<1x16x32xf32>
    %126 = vector.shape_cast %125 : vector<1x16x32xf32> to vector<16x32xf32>
    %cst_32 = arith.constant dense<0.000000e+00> : vector<16x128xf32>
    %127 = tpu.matmul %126, %124, %cst_32 {dimension_numbers = #tpu.dot_dimension_numbers<[1], [0], [0], [1], [0, 0, 1, 1], [], []>} : vector<16x32xf32>, vector<32x128xf32>, vector<16x128xf32> -> vector<16x128xf32>
    %cst_33 = arith.constant -1.000000e+30 : f32
    %128 = vector.broadcast %cst_33 : f32 to vector<16x128xf32>
    %129 = arith.select %42, %127, %128 : vector<16x128xi1>, vector<16x128xf32>
    %c112 = arith.constant 112 : index
    %c0_34 = arith.constant 0 : index
    %130 = vector.load %arg4[%c112, %c0_34] : memref<128x128xf32, #tpu.memory_space<vmem>>, vector<16x128xf32>
    tpu.vector_store %arg4[%c112, %c0_34], %129 {strides = array<i32>} : memref<128x128xf32, #tpu.memory_space<vmem>>, vector<16x128xf32>,
    %c17_i32_35 = arith.constant 17 : i32
    %131 = vector.broadcast %c17_i32_35 : i32 to vector<8x128xi32>
    %132 = arith.cmpi slt, %12, %131 : vector<8x128xi32>
    %c0_36 = arith.constant 0 : index
    %c0_37 = arith.constant 0 : index
    %133 = tpu.strided_load %arg4[%c0_36, %c0_37] {strides = array<i32: 16, 1>} : memref<128x128xf32, #tpu.memory_space<vmem>>, vector<8x128xf32>
    %c2_i32_38 = arith.constant 2 : i32
    %134 = vector.broadcast %c2_i32_38 : i32 to vector<8x128xi32>
    %135 = arith.cmpi slt, %12, %134 : vector<8x128xi32>
    %cst_39 = arith.constant -1.000000e+30 : f32
    %136 = vector.broadcast %cst_39 : f32 to vector<8x128xf32>
    %137 = arith.select %135, %133, %136 : vector<8x128xi1>, vector<8x128xf32>
    %c1_i32_40 = arith.constant 1 : i32
    %138 = vector.broadcast %c1_i32_40 : i32 to vector<8x128xi32>
    %139 = arith.cmpi sge, %12, %138 : vector<8x128xi32>
    %c1_i32_41 = arith.constant 1 : i32
    %140 = tpu.dynamic_rotate %137 by %c1_i32_41 dim 1 : vector<8x128xf32>, i32 -> vector<8x128xf32>
    %cst_42 = arith.constant -1.000000e+30 : f32
    %141 = vector.broadcast %cst_42 : f32 to vector<8x128xf32>
    %142 = arith.select %139, %140, %141 : vector<8x128xi1>, vector<8x128xf32>
    %c2_i32_43 = arith.constant 2 : i32
    %143 = tpu.dynamic_rotate %137 by %c2_i32_43 dim 1 : vector<8x128xf32>, i32 -> vector<8x128xf32>
    %cst_44 = arith.constant -1.000000e+30 : f32
    %144 = vector.broadcast %cst_44 : f32 to vector<8x128xf32>
    %145 = arith.select %38, %143, %144 : vector<8x128xi1>, vector<8x128xf32>
    %146 = arith.maximumf %137, %142 : vector<8x128xf32>
    %147 = arith.maximumf %146, %145 : vector<8x128xf32>
    %148 = arith.subf %137, %147 : vector<8x128xf32>
    %149 = math.exp %148 : vector<8x128xf32>
    %150 = arith.subf %142, %147 : vector<8x128xf32>
    %151 = math.exp %150 : vector<8x128xf32>
    %152 = arith.addf %149, %151 : vector<8x128xf32>
    %153 = arith.subf %145, %147 : vector<8x128xf32>
    %154 = math.exp %153 : vector<8x128xf32>
    %155 = arith.addf %152, %154 : vector<8x128xf32>
    %156 = math.log %155 : vector<8x128xf32>
    %157 = arith.addf %147, %156 : vector<8x128xf32>
    %c1 = arith.constant 1 : index
    %c0_45 = arith.constant 0 : index
    %158 = tpu.strided_load %arg4[%c1, %c0_45] {strides = array<i32: 16, 1>} : memref<128x128xf32, #tpu.memory_space<vmem>>, vector<8x128xf32>
    %159 = arith.addf %158, %157 : vector<8x128xf32>
    %cst_46 = arith.constant -1.000000e+30 : f32
    %160 = vector.broadcast %cst_46 : f32 to vector<8x128xf32>
    %161 = arith.select %132, %159, %160 : vector<8x128xi1>, vector<8x128xf32>
    %c1_i32_47 = arith.constant 1 : i32
    %162 = vector.broadcast %c1_i32_47 : i32 to vector<8x128xi32>
    %163 = arith.cmpi sge, %12, %162 : vector<8x128xi32>
    %c1_i32_48 = arith.constant 1 : i32
    %164 = tpu.dynamic_rotate %161 by %c1_i32_48 dim 1 : vector<8x128xf32>, i32 -> vector<8x128xf32>
    %cst_49 = arith.constant -1.000000e+30 : f32
    %165 = vector.broadcast %cst_49 : f32 to vector<8x128xf32>
    %166 = arith.select %163, %164, %165 : vector<8x128xi1>, vector<8x128xf32>
    %c2_i32_50 = arith.constant 2 : i32
    %167 = tpu.dynamic_rotate %161 by %c2_i32_50 dim 1 : vector<8x128xf32>, i32 -> vector<8x128xf32>
    %cst_51 = arith.constant -1.000000e+30 : f32
    %168 = vector.broadcast %cst_51 : f32 to vector<8x128xf32>
    %169 = arith.select %38, %167, %168 : vector<8x128xi1>, vector<8x128xf32>
    %170 = arith.maximumf %161, %166 : vector<8x128xf32>
    %171 = arith.maximumf %170, %169 : vector<8x128xf32>
    %172 = arith.subf %161, %171 : vector<8x128xf32>
    %173 = math.exp %172 : vector<8x128xf32>
    %174 = arith.subf %166, %171 : vector<8x128xf32>
    %175 = math.exp %174 : vector<8x128xf32>
    %176 = arith.addf %173, %175 : vector<8x128xf32>
    %177 = arith.subf %169, %171 : vector<8x128xf32>
    %178 = math.exp %177 : vector<8x128xf32>
    %179 = arith.addf %176, %178 : vector<8x128xf32>
    %180 = math.log %179 : vector<8x128xf32>
    %181 = arith.addf %171, %180 : vector<8x128xf32>
    %c2 = arith.constant 2 : index
    %c0_52 = arith.constant 0 : index
    %182 = tpu.strided_load %arg4[%c2, %c0_52] {strides = array<i32: 16, 1>} : memref<128x128xf32, #tpu.memory_space<vmem>>, vector<8x128xf32>
    %183 = arith.addf %182, %181 : vector<8x128xf32>
    %cst_53 = arith.constant -1.000000e+30 : f32
    %184 = vector.broadcast %cst_53 : f32 to vector<8x128xf32>
    %185 = arith.select %132, %183, %184 : vector<8x128xi1>, vector<8x128xf32>
    %c1_i32_54 = arith.constant 1 : i32
    %186 = vector.broadcast %c1_i32_54 : i32 to vector<8x128xi32>
    %187 = arith.cmpi sge, %12, %186 : vector<8x128xi32>
    %c1_i32_55 = arith.constant 1 : i32
    %188 = tpu.dynamic_rotate %185 by %c1_i32_55 dim 1 : vector<8x128xf32>, i32 -> vector<8x128xf32>
    %cst_56 = arith.constant -1.000000e+30 : f32
    %189 = vector.broadcast %cst_56 : f32 to vector<8x128xf32>
    %190 = arith.select %187, %188, %189 : vector<8x128xi1>, vector<8x128xf32>
    %c2_i32_57 = arith.constant 2 : i32
    %191 = tpu.dynamic_rotate %185 by %c2_i32_57 dim 1 : vector<8x128xf32>, i32 -> vector<8x128xf32>
    %cst_58 = arith.constant -1.000000e+30 : f32
    %192 = vector.broadcast %cst_58 : f32 to vector<8x128xf32>
    %193 = arith.select %38, %191, %192 : vector<8x128xi1>, vector<8x128xf32>
    %194 = arith.maximumf %185, %190 : vector<8x128xf32>
    %195 = arith.maximumf %194, %193 : vector<8x128xf32>
    %196 = arith.subf %185, %195 : vector<8x128xf32>
    %197 = math.exp %196 : vector<8x128xf32>
    %198 = arith.subf %190, %195 : vector<8x128xf32>
    %199 = math.exp %198 : vector<8x128xf32>
    %200 = arith.addf %197, %199 : vector<8x128xf32>
    %201 = arith.subf %193, %195 : vector<8x128xf32>
    %202 = math.exp %201 : vector<8x128xf32>
    %203 = arith.addf %200, %202 : vector<8x128xf32>
    %204 = math.log %203 : vector<8x128xf32>
    %205 = arith.addf %195, %204 : vector<8x128xf32>
    %c3 = arith.constant 3 : index
    %c0_59 = arith.constant 0 : index
    %206 = tpu.strided_load %arg4[%c3, %c0_59] {strides = array<i32: 16, 1>} : memref<128x128xf32, #tpu.memory_space<vmem>>, vector<8x128xf32>
    %207 = arith.addf %206, %205 : vector<8x128xf32>
    %cst_60 = arith.constant -1.000000e+30 : f32
    %208 = vector.broadcast %cst_60 : f32 to vector<8x128xf32>
    %209 = arith.select %132, %207, %208 : vector<8x128xi1>, vector<8x128xf32>
    %c1_i32_61 = arith.constant 1 : i32
    %210 = vector.broadcast %c1_i32_61 : i32 to vector<8x128xi32>
    %211 = arith.cmpi sge, %12, %210 : vector<8x128xi32>
    %c1_i32_62 = arith.constant 1 : i32
    %212 = tpu.dynamic_rotate %209 by %c1_i32_62 dim 1 : vector<8x128xf32>, i32 -> vector<8x128xf32>
    %cst_63 = arith.constant -1.000000e+30 : f32
    %213 = vector.broadcast %cst_63 : f32 to vector<8x128xf32>
    %214 = arith.select %211, %212, %213 : vector<8x128xi1>, vector<8x128xf32>
    %c2_i32_64 = arith.constant 2 : i32
    %215 = tpu.dynamic_rotate %209 by %c2_i32_64 dim 1 : vector<8x128xf32>, i32 -> vector<8x128xf32>
    %cst_65 = arith.constant -1.000000e+30 : f32
    %216 = vector.broadcast %cst_65 : f32 to vector<8x128xf32>
    %217 = arith.select %38, %215, %216 : vector<8x128xi1>, vector<8x128xf32>
    %218 = arith.maximumf %209, %214 : vector<8x128xf32>
    %219 = arith.maximumf %218, %217 : vector<8x128xf32>
    %220 = arith.subf %209, %219 : vector<8x128xf32>
    %221 = math.exp %220 : vector<8x128xf32>
    %222 = arith.subf %214, %219 : vector<8x128xf32>
    %223 = math.exp %222 : vector<8x128xf32>
    %224 = arith.addf %221, %223 : vector<8x128xf32>
    %225 = arith.subf %217, %219 : vector<8x128xf32>
    %226 = math.exp %225 : vector<8x128xf32>
    %227 = arith.addf %224, %226 : vector<8x128xf32>
    %228 = math.log %227 : vector<8x128xf32>
    %229 = arith.addf %219, %228 : vector<8x128xf32>
    %c4 = arith.constant 4 : index
    %c0_66 = arith.constant 0 : index
    %230 = tpu.strided_load %arg4[%c4, %c0_66] {strides = array<i32: 16, 1>} : memref<128x128xf32, #tpu.memory_space<vmem>>, vector<8x128xf32>
    %231 = arith.addf %230, %229 : vector<8x128xf32>
    %cst_67 = arith.constant -1.000000e+30 : f32
    %232 = vector.broadcast %cst_67 : f32 to vector<8x128xf32>
    %233 = arith.select %132, %231, %232 : vector<8x128xi1>, vector<8x128xf32>
    %c1_i32_68 = arith.constant 1 : i32
    %234 = vector.broadcast %c1_i32_68 : i32 to vector<8x128xi32>
    %235 = arith.cmpi sge, %12, %234 : vector<8x128xi32>
    %c1_i32_69 = arith.constant 1 : i32
    %236 = tpu.dynamic_rotate %233 by %c1_i32_69 dim 1 : vector<8x128xf32>, i32 -> vector<8x128xf32>
    %cst_70 = arith.constant -1.000000e+30 : f32
    %237 = vector.broadcast %cst_70 : f32 to vector<8x128xf32>
    %238 = arith.select %235, %236, %237 : vector<8x128xi1>, vector<8x128xf32>
    %c2_i32_71 = arith.constant 2 : i32
    %239 = tpu.dynamic_rotate %233 by %c2_i32_71 dim 1 : vector<8x128xf32>, i32 -> vector<8x128xf32>
    %cst_72 = arith.constant -1.000000e+30 : f32
    %240 = vector.broadcast %cst_72 : f32 to vector<8x128xf32>
    %241 = arith.select %38, %239, %240 : vector<8x128xi1>, vector<8x128xf32>
    %242 = arith.maximumf %233, %238 : vector<8x128xf32>
    %243 = arith.maximumf %242, %241 : vector<8x128xf32>
    %244 = arith.subf %233, %243 : vector<8x128xf32>
    %245 = math.exp %244 : vector<8x128xf32>
    %246 = arith.subf %238, %243 : vector<8x128xf32>
    %247 = math.exp %246 : vector<8x128xf32>
    %248 = arith.addf %245, %247 : vector<8x128xf32>
    %249 = arith.subf %241, %243 : vector<8x128xf32>
    %250 = math.exp %249 : vector<8x128xf32>
    %251 = arith.addf %248, %250 : vector<8x128xf32>
    %252 = math.log %251 : vector<8x128xf32>
    %253 = arith.addf %243, %252 : vector<8x128xf32>
    %c5 = arith.constant 5 : index
    %c0_73 = arith.constant 0 : index
    %254 = tpu.strided_load %arg4[%c5, %c0_73] {strides = array<i32: 16, 1>} : memref<128x128xf32, #tpu.memory_space<vmem>>, vector<8x128xf32>
    %255 = arith.addf %254, %253 : vector<8x128xf32>
    %cst_74 = arith.constant -1.000000e+30 : f32
    %256 = vector.broadcast %cst_74 : f32 to vector<8x128xf32>
    %257 = arith.select %132, %255, %256 : vector<8x128xi1>, vector<8x128xf32>
    %c1_i32_75 = arith.constant 1 : i32
    %258 = vector.broadcast %c1_i32_75 : i32 to vector<8x128xi32>
    %259 = arith.cmpi sge, %12, %258 : vector<8x128xi32>
    %c1_i32_76 = arith.constant 1 : i32
    %260 = tpu.dynamic_rotate %257 by %c1_i32_76 dim 1 : vector<8x128xf32>, i32 -> vector<8x128xf32>
    %cst_77 = arith.constant -1.000000e+30 : f32
    %261 = vector.broadcast %cst_77 : f32 to vector<8x128xf32>
    %262 = arith.select %259, %260, %261 : vector<8x128xi1>, vector<8x128xf32>
    %c2_i32_78 = arith.constant 2 : i32
    %263 = tpu.dynamic_rotate %257 by %c2_i32_78 dim 1 : vector<8x128xf32>, i32 -> vector<8x128xf32>
    %cst_79 = arith.constant -1.000000e+30 : f32
    %264 = vector.broadcast %cst_79 : f32 to vector<8x128xf32>
    %265 = arith.select %38, %263, %264 : vector<8x128xi1>, vector<8x128xf32>
    %266 = arith.maximumf %257, %262 : vector<8x128xf32>
    %267 = arith.maximumf %266, %265 : vector<8x128xf32>
    %268 = arith.subf %257, %267 : vector<8x128xf32>
    %269 = math.exp %268 : vector<8x128xf32>
    %270 = arith.subf %262, %267 : vector<8x128xf32>
    %271 = math.exp %270 : vector<8x128xf32>
    %272 = arith.addf %269, %271 : vector<8x128xf32>
    %273 = arith.subf %265, %267 : vector<8x128xf32>
    %274 = math.exp %273 : vector<8x128xf32>
    %275 = arith.addf %272, %274 : vector<8x128xf32>
    %276 = math.log %275 : vector<8x128xf32>
    %277 = arith.addf %267, %276 : vector<8x128xf32>
    %c6 = arith.constant 6 : index
    %c0_80 = arith.constant 0 : index
    %278 = tpu.strided_load %arg4[%c6, %c0_80] {strides = array<i32: 16, 1>} : memref<128x128xf32, #tpu.memory_space<vmem>>, vector<8x128xf32>
    %279 = arith.addf %278, %277 : vector<8x128xf32>
    %cst_81 = arith.constant -1.000000e+30 : f32
    %280 = vector.broadcast %cst_81 : f32 to vector<8x128xf32>
    %281 = arith.select %132, %279, %280 : vector<8x128xi1>, vector<8x128xf32>
    %c1_i32_82 = arith.constant 1 : i32
    %282 = vector.broadcast %c1_i32_82 : i32 to vector<8x128xi32>
    %283 = arith.cmpi sge, %12, %282 : vector<8x128xi32>
    %c1_i32_83 = arith.constant 1 : i32
    %284 = tpu.dynamic_rotate %281 by %c1_i32_83 dim 1 : vector<8x128xf32>, i32 -> vector<8x128xf32>
    %cst_84 = arith.constant -1.000000e+30 : f32
    %285 = vector.broadcast %cst_84 : f32 to vector<8x128xf32>
    %286 = arith.select %283, %284, %285 : vector<8x128xi1>, vector<8x128xf32>
    %c2_i32_85 = arith.constant 2 : i32
    %287 = tpu.dynamic_rotate %281 by %c2_i32_85 dim 1 : vector<8x128xf32>, i32 -> vector<8x128xf32>
    %cst_86 = arith.constant -1.000000e+30 : f32
    %288 = vector.broadcast %cst_86 : f32 to vector<8x128xf32>
    %289 = arith.select %38, %287, %288 : vector<8x128xi1>, vector<8x128xf32>
    %290 = arith.maximumf %281, %286 : vector<8x128xf32>
    %291 = arith.maximumf %290, %289 : vector<8x128xf32>
    %292 = arith.subf %281, %291 : vector<8x128xf32>
    %293 = math.exp %292 : vector<8x128xf32>
    %294 = arith.subf %286, %291 : vector<8x128xf32>
    %295 = math.exp %294 : vector<8x128xf32>
    %296 = arith.addf %293, %295 : vector<8x128xf32>
    %297 = arith.subf %289, %291 : vector<8x128xf32>
    %298 = math.exp %297 : vector<8x128xf32>
    %299 = arith.addf %296, %298 : vector<8x128xf32>
    %300 = math.log %299 : vector<8x128xf32>
    %301 = arith.addf %291, %300 : vector<8x128xf32>
    %c7 = arith.constant 7 : index
    %c0_87 = arith.constant 0 : index
    %302 = tpu.strided_load %arg4[%c7, %c0_87] {strides = array<i32: 16, 1>} : memref<128x128xf32, #tpu.memory_space<vmem>>, vector<8x128xf32>
    %303 = arith.addf %302, %301 : vector<8x128xf32>
    %cst_88 = arith.constant -1.000000e+30 : f32
    %304 = vector.broadcast %cst_88 : f32 to vector<8x128xf32>
    %305 = arith.select %132, %303, %304 : vector<8x128xi1>, vector<8x128xf32>
    %c1_i32_89 = arith.constant 1 : i32
    %306 = vector.broadcast %c1_i32_89 : i32 to vector<8x128xi32>
    %307 = arith.cmpi sge, %12, %306 : vector<8x128xi32>
    %c1_i32_90 = arith.constant 1 : i32
    %308 = tpu.dynamic_rotate %305 by %c1_i32_90 dim 1 : vector<8x128xf32>, i32 -> vector<8x128xf32>
    %cst_91 = arith.constant -1.000000e+30 : f32
    %309 = vector.broadcast %cst_91 : f32 to vector<8x128xf32>
    %310 = arith.select %307, %308, %309 : vector<8x128xi1>, vector<8x128xf32>
    %c2_i32_92 = arith.constant 2 : i32
    %311 = tpu.dynamic_rotate %305 by %c2_i32_92 dim 1 : vector<8x128xf32>, i32 -> vector<8x128xf32>
    %cst_93 = arith.constant -1.000000e+30 : f32
    %312 = vector.broadcast %cst_93 : f32 to vector<8x128xf32>
    %313 = arith.select %38, %311, %312 : vector<8x128xi1>, vector<8x128xf32>
    %314 = arith.maximumf %305, %310 : vector<8x128xf32>
    %315 = arith.maximumf %314, %313 : vector<8x128xf32>
    %316 = arith.subf %305, %315 : vector<8x128xf32>
    %317 = math.exp %316 : vector<8x128xf32>
    %318 = arith.subf %310, %315 : vector<8x128xf32>
    %319 = math.exp %318 : vector<8x128xf32>
    %320 = arith.addf %317, %319 : vector<8x128xf32>
    %321 = arith.subf %313, %315 : vector<8x128xf32>
    %322 = math.exp %321 : vector<8x128xf32>
    %323 = arith.addf %320, %322 : vector<8x128xf32>
    %324 = math.log %323 : vector<8x128xf32>
    %325 = arith.addf %315, %324 : vector<8x128xf32>
    %c8 = arith.constant 8 : index
    %c0_94 = arith.constant 0 : index
    %326 = tpu.strided_load %arg4[%c8, %c0_94] {strides = array<i32: 16, 1>} : memref<128x128xf32, #tpu.memory_space<vmem>>, vector<8x128xf32>
    %327 = arith.addf %326, %325 : vector<8x128xf32>
    %cst_95 = arith.constant -1.000000e+30 : f32
    %328 = vector.broadcast %cst_95 : f32 to vector<8x128xf32>
    %329 = arith.select %132, %327, %328 : vector<8x128xi1>, vector<8x128xf32>
    %c1_i32_96 = arith.constant 1 : i32
    %330 = vector.broadcast %c1_i32_96 : i32 to vector<8x128xi32>
    %331 = arith.cmpi sge, %12, %330 : vector<8x128xi32>
    %c1_i32_97 = arith.constant 1 : i32
    %332 = tpu.dynamic_rotate %329 by %c1_i32_97 dim 1 : vector<8x128xf32>, i32 -> vector<8x128xf32>
    %cst_98 = arith.constant -1.000000e+30 : f32
    %333 = vector.broadcast %cst_98 : f32 to vector<8x128xf32>
    %334 = arith.select %331, %332, %333 : vector<8x128xi1>, vector<8x128xf32>
    %c2_i32_99 = arith.constant 2 : i32
    %335 = tpu.dynamic_rotate %329 by %c2_i32_99 dim 1 : vector<8x128xf32>, i32 -> vector<8x128xf32>
    %cst_100 = arith.constant -1.000000e+30 : f32
    %336 = vector.broadcast %cst_100 : f32 to vector<8x128xf32>
    %337 = arith.select %38, %335, %336 : vector<8x128xi1>, vector<8x128xf32>
    %338 = arith.maximumf %329, %334 : vector<8x128xf32>
    %339 = arith.maximumf %338, %337 : vector<8x128xf32>
    %340 = arith.subf %329, %339 : vector<8x128xf32>
    %341 = math.exp %340 : vector<8x128xf32>
    %342 = arith.subf %334, %339 : vector<8x128xf32>
    %343 = math.exp %342 : vector<8x128xf32>
    %344 = arith.addf %341, %343 : vector<8x128xf32>
    %345 = arith.subf %337, %339 : vector<8x128xf32>
    %346 = math.exp %345 : vector<8x128xf32>
    %347 = arith.addf %344, %346 : vector<8x128xf32>
    %348 = math.log %347 : vector<8x128xf32>
    %349 = arith.addf %339, %348 : vector<8x128xf32>
    %c9 = arith.constant 9 : index
    %c0_101 = arith.constant 0 : index
    %350 = tpu.strided_load %arg4[%c9, %c0_101] {strides = array<i32: 16, 1>} : memref<128x128xf32, #tpu.memory_space<vmem>>, vector<8x128xf32>
    %351 = arith.addf %350, %349 : vector<8x128xf32>
    %cst_102 = arith.constant -1.000000e+30 : f32
    %352 = vector.broadcast %cst_102 : f32 to vector<8x128xf32>
    %353 = arith.select %132, %351, %352 : vector<8x128xi1>, vector<8x128xf32>
    %c1_i32_103 = arith.constant 1 : i32
    %354 = vector.broadcast %c1_i32_103 : i32 to vector<8x128xi32>
    %355 = arith.cmpi sge, %12, %354 : vector<8x128xi32>
    %c1_i32_104 = arith.constant 1 : i32
    %356 = tpu.dynamic_rotate %353 by %c1_i32_104 dim 1 : vector<8x128xf32>, i32 -> vector<8x128xf32>
    %cst_105 = arith.constant -1.000000e+30 : f32
    %357 = vector.broadcast %cst_105 : f32 to vector<8x128xf32>
    %358 = arith.select %355, %356, %357 : vector<8x128xi1>, vector<8x128xf32>
    %c2_i32_106 = arith.constant 2 : i32
    %359 = tpu.dynamic_rotate %353 by %c2_i32_106 dim 1 : vector<8x128xf32>, i32 -> vector<8x128xf32>
    %cst_107 = arith.constant -1.000000e+30 : f32
    %360 = vector.broadcast %cst_107 : f32 to vector<8x128xf32>
    %361 = arith.select %38, %359, %360 : vector<8x128xi1>, vector<8x128xf32>
    %362 = arith.maximumf %353, %358 : vector<8x128xf32>
    %363 = arith.maximumf %362, %361 : vector<8x128xf32>
    %364 = arith.subf %353, %363 : vector<8x128xf32>
    %365 = math.exp %364 : vector<8x128xf32>
    %366 = arith.subf %358, %363 : vector<8x128xf32>
    %367 = math.exp %366 : vector<8x128xf32>
    %368 = arith.addf %365, %367 : vector<8x128xf32>
    %369 = arith.subf %361, %363 : vector<8x128xf32>
    %370 = math.exp %369 : vector<8x128xf32>
    %371 = arith.addf %368, %370 : vector<8x128xf32>
    %372 = math.log %371 : vector<8x128xf32>
    %373 = arith.addf %363, %372 : vector<8x128xf32>
    %c10 = arith.constant 10 : index
    %c0_108 = arith.constant 0 : index
    %374 = tpu.strided_load %arg4[%c10, %c0_108] {strides = array<i32: 16, 1>} : memref<128x128xf32, #tpu.memory_space<vmem>>, vector<8x128xf32>
    %375 = arith.addf %374, %373 : vector<8x128xf32>
    %cst_109 = arith.constant -1.000000e+30 : f32
    %376 = vector.broadcast %cst_109 : f32 to vector<8x128xf32>
    %377 = arith.select %132, %375, %376 : vector<8x128xi1>, vector<8x128xf32>
    %c1_i32_110 = arith.constant 1 : i32
    %378 = vector.broadcast %c1_i32_110 : i32 to vector<8x128xi32>
    %379 = arith.cmpi sge, %12, %378 : vector<8x128xi32>
    %c1_i32_111 = arith.constant 1 : i32
    %380 = tpu.dynamic_rotate %377 by %c1_i32_111 dim 1 : vector<8x128xf32>, i32 -> vector<8x128xf32>
    %cst_112 = arith.constant -1.000000e+30 : f32
    %381 = vector.broadcast %cst_112 : f32 to vector<8x128xf32>
    %382 = arith.select %379, %380, %381 : vector<8x128xi1>, vector<8x128xf32>
    %c2_i32_113 = arith.constant 2 : i32
    %383 = tpu.dynamic_rotate %377 by %c2_i32_113 dim 1 : vector<8x128xf32>, i32 -> vector<8x128xf32>
    %cst_114 = arith.constant -1.000000e+30 : f32
    %384 = vector.broadcast %cst_114 : f32 to vector<8x128xf32>
    %385 = arith.select %38, %383, %384 : vector<8x128xi1>, vector<8x128xf32>
    %386 = arith.maximumf %377, %382 : vector<8x128xf32>
    %387 = arith.maximumf %386, %385 : vector<8x128xf32>
    %388 = arith.subf %377, %387 : vector<8x128xf32>
    %389 = math.exp %388 : vector<8x128xf32>
    %390 = arith.subf %382, %387 : vector<8x128xf32>
    %391 = math.exp %390 : vector<8x128xf32>
    %392 = arith.addf %389, %391 : vector<8x128xf32>
    %393 = arith.subf %385, %387 : vector<8x128xf32>
    %394 = math.exp %393 : vector<8x128xf32>
    %395 = arith.addf %392, %394 : vector<8x128xf32>
    %396 = math.log %395 : vector<8x128xf32>
    %397 = arith.addf %387, %396 : vector<8x128xf32>
    %c11 = arith.constant 11 : index
    %c0_115 = arith.constant 0 : index
    %398 = tpu.strided_load %arg4[%c11, %c0_115] {strides = array<i32: 16, 1>} : memref<128x128xf32, #tpu.memory_space<vmem>>, vector<8x128xf32>
    %399 = arith.addf %398, %397 : vector<8x128xf32>
    %cst_116 = arith.constant -1.000000e+30 : f32
    %400 = vector.broadcast %cst_116 : f32 to vector<8x128xf32>
    %401 = arith.select %132, %399, %400 : vector<8x128xi1>, vector<8x128xf32>
    %c1_i32_117 = arith.constant 1 : i32
    %402 = vector.broadcast %c1_i32_117 : i32 to vector<8x128xi32>
    %403 = arith.cmpi sge, %12, %402 : vector<8x128xi32>
    %c1_i32_118 = arith.constant 1 : i32
    %404 = tpu.dynamic_rotate %401 by %c1_i32_118 dim 1 : vector<8x128xf32>, i32 -> vector<8x128xf32>
    %cst_119 = arith.constant -1.000000e+30 : f32
    %405 = vector.broadcast %cst_119 : f32 to vector<8x128xf32>
    %406 = arith.select %403, %404, %405 : vector<8x128xi1>, vector<8x128xf32>
    %c2_i32_120 = arith.constant 2 : i32
    %407 = tpu.dynamic_rotate %401 by %c2_i32_120 dim 1 : vector<8x128xf32>, i32 -> vector<8x128xf32>
    %cst_121 = arith.constant -1.000000e+30 : f32
    %408 = vector.broadcast %cst_121 : f32 to vector<8x128xf32>
    %409 = arith.select %38, %407, %408 : vector<8x128xi1>, vector<8x128xf32>
    %410 = arith.maximumf %401, %406 : vector<8x128xf32>
    %411 = arith.maximumf %410, %409 : vector<8x128xf32>
    %412 = arith.subf %401, %411 : vector<8x128xf32>
    %413 = math.exp %412 : vector<8x128xf32>
    %414 = arith.subf %406, %411 : vector<8x128xf32>
    %415 = math.exp %414 : vector<8x128xf32>
    %416 = arith.addf %413, %415 : vector<8x128xf32>
    %417 = arith.subf %409, %411 : vector<8x128xf32>
    %418 = math.exp %417 : vector<8x128xf32>
    %419 = arith.addf %416, %418 : vector<8x128xf32>
    %420 = math.log %419 : vector<8x128xf32>
    %421 = arith.addf %411, %420 : vector<8x128xf32>
    %c12 = arith.constant 12 : index
    %c0_122 = arith.constant 0 : index
    %422 = tpu.strided_load %arg4[%c12, %c0_122] {strides = array<i32: 16, 1>} : memref<128x128xf32, #tpu.memory_space<vmem>>, vector<8x128xf32>
    %423 = arith.addf %422, %421 : vector<8x128xf32>
    %cst_123 = arith.constant -1.000000e+30 : f32
    %424 = vector.broadcast %cst_123 : f32 to vector<8x128xf32>
    %425 = arith.select %132, %423, %424 : vector<8x128xi1>, vector<8x128xf32>
    %c1_i32_124 = arith.constant 1 : i32
    %426 = vector.broadcast %c1_i32_124 : i32 to vector<8x128xi32>
    %427 = arith.cmpi sge, %12, %426 : vector<8x128xi32>
    %c1_i32_125 = arith.constant 1 : i32
    %428 = tpu.dynamic_rotate %425 by %c1_i32_125 dim 1 : vector<8x128xf32>, i32 -> vector<8x128xf32>
    %cst_126 = arith.constant -1.000000e+30 : f32
    %429 = vector.broadcast %cst_126 : f32 to vector<8x128xf32>
    %430 = arith.select %427, %428, %429 : vector<8x128xi1>, vector<8x128xf32>
    %c2_i32_127 = arith.constant 2 : i32
    %431 = tpu.dynamic_rotate %425 by %c2_i32_127 dim 1 : vector<8x128xf32>, i32 -> vector<8x128xf32>
    %cst_128 = arith.constant -1.000000e+30 : f32
    %432 = vector.broadcast %cst_128 : f32 to vector<8x128xf32>
    %433 = arith.select %38, %431, %432 : vector<8x128xi1>, vector<8x128xf32>
    %434 = arith.maximumf %425, %430 : vector<8x128xf32>
    %435 = arith.maximumf %434, %433 : vector<8x128xf32>
    %436 = arith.subf %425, %435 : vector<8x128xf32>
    %437 = math.exp %436 : vector<8x128xf32>
    %438 = arith.subf %430, %435 : vector<8x128xf32>
    %439 = math.exp %438 : vector<8x128xf32>
    %440 = arith.addf %437, %439 : vector<8x128xf32>
    %441 = arith.subf %433, %435 : vector<8x128xf32>
    %442 = math.exp %441 : vector<8x128xf32>
    %443 = arith.addf %440, %442 : vector<8x128xf32>
    %444 = math.log %443 : vector<8x128xf32>
    %445 = arith.addf %435, %444 : vector<8x128xf32>
    %c13 = arith.constant 13 : index
    %c0_129 = arith.constant 0 : index
    %446 = tpu.strided_load %arg4[%c13, %c0_129] {strides = array<i32: 16, 1>} : memref<128x128xf32, #tpu.memory_space<vmem>>, vector<8x128xf32>
    %447 = arith.addf %446, %445 : vector<8x128xf32>
    %cst_130 = arith.constant -1.000000e+30 : f32
    %448 = vector.broadcast %cst_130 : f32 to vector<8x128xf32>
    %449 = arith.select %132, %447, %448 : vector<8x128xi1>, vector<8x128xf32>
    %c1_i32_131 = arith.constant 1 : i32
    %450 = vector.broadcast %c1_i32_131 : i32 to vector<8x128xi32>
    %451 = arith.cmpi sge, %12, %450 : vector<8x128xi32>
    %c1_i32_132 = arith.constant 1 : i32
    %452 = tpu.dynamic_rotate %449 by %c1_i32_132 dim 1 : vector<8x128xf32>, i32 -> vector<8x128xf32>
    %cst_133 = arith.constant -1.000000e+30 : f32
    %453 = vector.broadcast %cst_133 : f32 to vector<8x128xf32>
    %454 = arith.select %451, %452, %453 : vector<8x128xi1>, vector<8x128xf32>
    %c2_i32_134 = arith.constant 2 : i32
    %455 = tpu.dynamic_rotate %449 by %c2_i32_134 dim 1 : vector<8x128xf32>, i32 -> vector<8x128xf32>
    %cst_135 = arith.constant -1.000000e+30 : f32
    %456 = vector.broadcast %cst_135 : f32 to vector<8x128xf32>
    %457 = arith.select %38, %455, %456 : vector<8x128xi1>, vector<8x128xf32>
    %458 = arith.maximumf %449, %454 : vector<8x128xf32>
    %459 = arith.maximumf %458, %457 : vector<8x128xf32>
    %460 = arith.subf %449, %459 : vector<8x128xf32>
    %461 = math.exp %460 : vector<8x128xf32>
    %462 = arith.subf %454, %459 : vector<8x128xf32>
    %463 = math.exp %462 : vector<8x128xf32>
    %464 = arith.addf %461, %463 : vector<8x128xf32>
    %465 = arith.subf %457, %459 : vector<8x128xf32>
    %466 = math.exp %465 : vector<8x128xf32>
    %467 = arith.addf %464, %466 : vector<8x128xf32>
    %468 = math.log %467 : vector<8x128xf32>
    %469 = arith.addf %459, %468 : vector<8x128xf32>
    %c14 = arith.constant 14 : index
    %c0_136 = arith.constant 0 : index
    %470 = tpu.strided_load %arg4[%c14, %c0_136] {strides = array<i32: 16, 1>} : memref<128x128xf32, #tpu.memory_space<vmem>>, vector<8x128xf32>
    %471 = arith.addf %470, %469 : vector<8x128xf32>
    %cst_137 = arith.constant -1.000000e+30 : f32
    %472 = vector.broadcast %cst_137 : f32 to vector<8x128xf32>
    %473 = arith.select %132, %471, %472 : vector<8x128xi1>, vector<8x128xf32>
    %c1_i32_138 = arith.constant 1 : i32
    %474 = vector.broadcast %c1_i32_138 : i32 to vector<8x128xi32>
    %475 = arith.cmpi sge, %12, %474 : vector<8x128xi32>
    %c1_i32_139 = arith.constant 1 : i32
    %476 = tpu.dynamic_rotate %473 by %c1_i32_139 dim 1 : vector<8x128xf32>, i32 -> vector<8x128xf32>
    %cst_140 = arith.constant -1.000000e+30 : f32
    %477 = vector.broadcast %cst_140 : f32 to vector<8x128xf32>
    %478 = arith.select %475, %476, %477 : vector<8x128xi1>, vector<8x128xf32>
    %c2_i32_141 = arith.constant 2 : i32
    %479 = tpu.dynamic_rotate %473 by %c2_i32_141 dim 1 : vector<8x128xf32>, i32 -> vector<8x128xf32>
    %cst_142 = arith.constant -1.000000e+30 : f32
    %480 = vector.broadcast %cst_142 : f32 to vector<8x128xf32>
    %481 = arith.select %38, %479, %480 : vector<8x128xi1>, vector<8x128xf32>
    %482 = arith.maximumf %473, %478 : vector<8x128xf32>
    %483 = arith.maximumf %482, %481 : vector<8x128xf32>
    %484 = arith.subf %473, %483 : vector<8x128xf32>
    %485 = math.exp %484 : vector<8x128xf32>
    %486 = arith.subf %478, %483 : vector<8x128xf32>
    %487 = math.exp %486 : vector<8x128xf32>
    %488 = arith.addf %485, %487 : vector<8x128xf32>
    %489 = arith.subf %481, %483 : vector<8x128xf32>
    %490 = math.exp %489 : vector<8x128xf32>
    %491 = arith.addf %488, %490 : vector<8x128xf32>
    %492 = math.log %491 : vector<8x128xf32>
    %493 = arith.addf %483, %492 : vector<8x128xf32>
    %c15 = arith.constant 15 : index
    %c0_143 = arith.constant 0 : index
    %494 = tpu.strided_load %arg4[%c15, %c0_143] {strides = array<i32: 16, 1>} : memref<128x128xf32, #tpu.memory_space<vmem>>, vector<8x128xf32>
    %495 = arith.addf %494, %493 : vector<8x128xf32>
    %cst_144 = arith.constant -1.000000e+30 : f32
    %496 = vector.broadcast %cst_144 : f32 to vector<8x128xf32>
    %497 = arith.select %132, %495, %496 : vector<8x128xi1>, vector<8x128xf32>
    %c16_i32 = arith.constant 16 : i32
    %498 = vector.broadcast %c16_i32 : i32 to vector<8x128xi32>
    %499 = arith.cmpi eq, %12, %498 : vector<8x128xi32>
    %c15_i32 = arith.constant 15 : i32
    %500 = vector.broadcast %c15_i32 : i32 to vector<8x128xi32>
    %501 = arith.cmpi eq, %12, %500 : vector<8x128xi32>
    %502 = arith.ori %499, %501 : vector<8x128xi1>
    %cst_145 = arith.constant -1.000000e+30 : f32
    %503 = vector.broadcast %cst_145 : f32 to vector<8x128xf32>
    %504 = arith.select %502, %497, %503 : vector<8x128xi1>, vector<8x128xf32>
    %cst_146 = arith.constant dense<0xFF800000> : vector<8xf32>
    %505 = vector.multi_reduction <maximumf>, %504, %cst_146 [1] : vector<8x128xf32> to vector<8xf32>
    %506 = vector.shape_cast %505 : vector<8xf32> to vector<8x1xf32>
    %507 = vector.broadcast %506 : vector<8x1xf32> to vector<8x128xf32>
    %508 = arith.subf %504, %507 : vector<8x128xf32>
    %509 = math.exp %508 : vector<8x128xf32>
    %cst_147 = arith.constant dense<0.000000e+00> : vector<8xf32>
    %510 = vector.multi_reduction <add>, %509, %cst_147 [1] : vector<8x128xf32> to vector<8xf32>
    %511 = vector.shape_cast %510 : vector<8xf32> to vector<8x1xf32>
    %512 = math.log %511 : vector<8x1xf32>
    %513 = arith.addf %506, %512 : vector<8x1xf32>
    %cst_148 = arith.constant 0.000000e+00 : f32
    %514 = vector.broadcast %cst_148 : f32 to vector<8x1xf32>
    %515 = arith.subf %514, %513 : vector<8x1xf32>
    %c0_149 = arith.constant 0 : index
    %c0_150 = arith.constant 0 : index
    %516 = vector.load %arg3[%c0_149, %c0_150] : memref<8x1xf32, #tpu.memory_space<vmem>>, vector<8x1xf32>
    tpu.vector_store %arg3[%c0_149, %c0_150], %515 {strides = array<i32>} : memref<8x1xf32, #tpu.memory_space<vmem>>, vector<8x1xf32>,
    return
  }
  func.func @transform_0(%arg0: i32) -> (i32, i32) {
    %c0_i32 = arith.constant 0 : i32
    %c0_i32_0 = arith.constant 0 : i32
    return %arg0, %c0_i32 : i32, i32
  }
  func.func @transform_1(%arg0: i32) -> (i32, i32, i32) {
    %c0_i32 = arith.constant 0 : i32
    %c0_i32_0 = arith.constant 0 : i32
    %c0_i32_1 = arith.constant 0 : i32
    return %arg0, %c0_i32, %c0_i32_0 : i32, i32, i32
  }
  func.func @transform_2(%arg0: i32) -> (i32, i32) {
    %c0_i32 = arith.constant 0 : i32
    %c0_i32_0 = arith.constant 0 : i32
    return %arg0, %c0_i32 : i32, i32
  }
}

</mosaic_0001>

<llo_original>
// kernel: tpu_custom_call.1
$region0: #{tpu_custom_call.1}
  #allocation0 [shape = 'u32[]', space=smem, size = 0x4, offset = 0x4, fixed_abs, tag = 'smem constant byte address 0x4 - core index']
  #allocation1 [shape = 'u32[72,128]{1,0:T(1,128)}', space=vmem, size = 0x9000, scoped, tag = 'internal scratch']
  #allocation2 [shape = 'f32[128,128]{1,0:T(8,128)}', space=vmem, size = 0x10000, scoped, tag = 'scratch operand']
  %s0 = inlined_call_operand.vmem [shape: s32[16,8], index: 0, kind: input, shape index: {}]
  %s1 = inlined_call_operand.hbm [shape: f32[16,16,32], index: 1, kind: input, shape index: {}]
  %s2 = inlined_call_operand.vmem [shape: f32[16,1], index: 2, kind: output, shape index: {}]
  %s3 = sld [smem:[#allocation0]]
  $region45: #{tpu_custom_call.1} parent=0
    _
  %s5 = ssub.s32 1, %s3
  %s6 = scalar_select 0, %s5, %s3
  $region1: #{tpu_custom_call.1} parent=0
    #allocation3 [shape = 'u8[131072]{0}', space=vmem, size = 0x20000, scoped, tag = 'input window, operand 1']
    #allocation4 [shape = 's32[2]{0}', space=sflag, size = 0x8, scoped, tag = 'scoped memory for tpu_custom_call.1']
    %7 = vsyncpa [#allocation4], 0
    %s8 = scalar_lea.sflag [#allocation4], 1
    %9 = vsyncpa %s8, 0
    loop: start=0, step=1, limit=4
    $region2: #{tpu_custom_call.1} parent=1 // loop_pre_header
      _
    $region3: #{tpu_custom_call.1} parent=1 // loop_header
      %s11 = sphi 0, %s15
      %p12 = scmp.ge.s32.totalorder %s11, 4
      %s21 = sphi 0, %s23
      %s24 = sphi 0, %s21
      %s25 = sphi 0, %s24
      %s41 = sphi 0, %s25
      %s47 = sphi 0, %s49
      %s50 = sphi 0, %s47
      %s51 = sphi 0, %s50
      %s67 = sphi 0, %s51
      %s73 = sphi 0, %s75
      %s76 = sphi 0, %s73
      %s77 = sphi 0, %s76
      %s93 = sphi 0, %s77
    $region4: #{tpu_custom_call.1} parent=1 // loop_header_branch
      %14 = sbr.rel (%p12) target = $region8
    $region5: #{tpu_custom_call.1} parent=1 // loop_body
      %s16 = ssub.s32 %s11, 1
      %s17 = ssub.s32 %s11, 2
      %s18 = sadd.s32 %s11, 1
      %s19 = ssub.s32 %s11, %s18
      %p20 = scmp.eq.s32.totalorder %s19, 0
      %s22 = sadd.s32 %s21, 1
      %s23 = scalar_select %p20, %s21, %s22
      %p26 = pneg %p20
      %p27 = scmp.eq.s32.totalorder %s11, 1
      %p28 = por %p26, %p27
      %p29 = scmp.ne.s32.totalorder %s21, %s24
      %p30 = scmp.eq.s32.totalorder %s11, 0
      %p31 = por %p29, %p30
      %p32 = scmp.ne.s32.totalorder %s21, %s24
      %p33 = scmp.eq.s32.totalorder %s16, 1
      %p34 = por %p32, %p33
      %p35 = scmp.ne.s32.totalorder %s24, %s25
      %p36 = scmp.eq.s32.totalorder %s16, 0
      %p37 = por %p35, %p36
      %p38 = scmp.ne.s32.totalorder %s24, %s25
      %p39 = scmp.eq.s32.totalorder %s17, 1
      %p40 = por %p38, %p39
      %p42 = scmp.ne.s32.totalorder %s25, %s41
      %p43 = scmp.eq.s32.totalorder %s17, 0
      %p44 = por %p42, %p43
      %s45 = ssub.s32 %s11, %s18
      %p46 = scmp.eq.s32.totalorder %s45, 0
      %s48 = sadd.s32 %s47, 1
      %s49 = scalar_select %p46, %s47, %s48
      %p52 = pneg %p46
      %p53 = scmp.eq.s32.totalorder %s11, 1
      %p54 = por %p52, %p53
      %p55 = scmp.ne.s32.totalorder %s47, %s50
      %p56 = scmp.eq.s32.totalorder %s11, 0
      %p57 = por %p55, %p56
      %p58 = scmp.ne.s32.totalorder %s47, %s50
      %p59 = scmp.eq.s32.totalorder %s16, 1
      %p60 = por %p58, %p59
      %p61 = scmp.ne.s32.totalorder %s50, %s51
      %p62 = scmp.eq.s32.totalorder %s16, 0
      %p63 = por %p61, %p62
      %p64 = scmp.ne.s32.totalorder %s50, %s51
      %p65 = scmp.eq.s32.totalorder %s17, 1
      %p66 = por %p64, %p65
      %p68 = scmp.ne.s32.totalorder %s51, %s67
      %p69 = scmp.eq.s32.totalorder %s17, 0
      %p70 = por %p68, %p69
      %s71 = ssub.s32 %s11, %s18
      %p72 = scmp.eq.s32.totalorder %s71, 0
      %s74 = sadd.s32 %s73, 1
      %s75 = scalar_select %p72, %s73, %s74
      %p78 = pneg %p72
      %p79 = scmp.eq.s32.totalorder %s11, 1
      %p80 = por %p78, %p79
      %p81 = scmp.ne.s32.totalorder %s73, %s76
      %p82 = scmp.eq.s32.totalorder %s11, 0
      %p83 = por %p81, %p82
      %p84 = scmp.ne.s32.totalorder %s73, %s76
      %p85 = scmp.eq.s32.totalorder %s16, 1
      %p86 = por %p84, %p85
      %p87 = scmp.ne.s32.totalorder %s76, %s77
      %p88 = scmp.eq.s32.totalorder %s16, 0
      %p89 = por %p87, %p88
      %p90 = scmp.ne.s32.totalorder %s76, %s77
      %p91 = scmp.eq.s32.totalorder %s17, 1
      %p92 = por %p90, %p91
      %p94 = scmp.ne.s32.totalorder %s77, %s93
      %p95 = scmp.eq.s32.totalorder %s17, 0
      %p96 = por %p94, %p95
      %p97 = scmp.le.s32.totalorder 1, %s11
      %p98 = scmp.lt.s32.totalorder %s11, 3
      %p99 = pnand %p97, %p98
      %p100 = pneg %p99
      // Predicated region
      $region9: #{tpu_custom_call.1} parent=5 // pred_check
        _
      $region10: #{tpu_custom_call.1} parent=5 // pred_check_branch
        %102 = sbr.rel (%p99) target = $region12
      $region11: #{tpu_custom_call.1} parent=5 // pred_region
        %s103 = ssub.s32 %s11, 1
      $region12: #{tpu_custom_call.1} parent=5 // pred_fallthru
        _
      %p104 = scmp.lt.s32.totalorder %s11, 2
      // Predicated region
      $region13: #{tpu_custom_call.1} parent=5 // pred_check
        %p105 = pneg %p104
      $region14: #{tpu_custom_call.1} parent=5 // pred_check_branch
        %107 = sbr.rel (%p105) target = $region16
      $region15: #{tpu_custom_call.1} parent=5 // pred_region
        // Predicated region
        $region17: #{tpu_custom_call.1} parent=15 // pred_check
          %p108 = pneg %p31
        $region18: #{tpu_custom_call.1} parent=15 // pred_check_branch
          %110 = sbr.rel (%p108) target = $region20
        $region19: #{tpu_custom_call.1} parent=15 // pred_region
          %p111 = scmp.lt.s32.totalorder %s11, 1
          %s112 = scalar_select %p111, %s11, 1
          %s113 = smul.addr %s112, 8
          %s114 = scalar_lea.vmem %s0, %s113
        $region20: #{tpu_custom_call.1} parent=15 // pred_fallthru
          _
        // Predicated region
        $region21: #{tpu_custom_call.1} parent=15 // pred_check
          %p115 = pneg %p57
        $region22: #{tpu_custom_call.1} parent=15 // pred_check_branch
          %117 = sbr.rel (%p115) target = $region24
        $region23: #{tpu_custom_call.1} parent=15 // pred_region
          %s118 = sand.u32 %s47, 1
          %s119 = scalar_lea.sflag [#allocation4], %s118
          %s120 = sand.u32 %s47, 1
          %s121 = smul.addr %s120, 128
          %s122 = scalar_lea.vmem [#allocation3], %s121
          %s123 = smul.u32 8, %s11
          %125 = vsyncadd %s119, 0
          %s126 = smul.addr %s123, 2
          %s127 = smul.addr %s126, 8
          %s128 = scalar_lea.hbm %s1, %s127
          %s129 = sshll.u32 %s128, 4
          %s130 = int_to_ptr.hbm [resolvable:$true] %s129
          %s131 = sshll.u32 %s122, 4
          %s132 = int_to_ptr.vmem [resolvable:$true] %s131
          %137 = dma.hbm_to_vmem [thread:$0]  %s130, 2048, %s132, %s119, 128, 128, 8
        $region24: #{tpu_custom_call.1} parent=15 // pred_fallthru
          _
      $region16: #{tpu_custom_call.1} parent=5 // pred_fallthru
        _
      %p138 = scmp.le.s32.totalorder 1, %s11
      %p139 = scmp.lt.s32.totalorder %s11, 3
      %p140 = pnand %p138, %p139
      %p141 = pneg %p140
      // Predicated region
      $region25: #{tpu_custom_call.1} parent=5 // pred_check
        _
      $region26: #{tpu_custom_call.1} parent=5 // pred_check_branch
        %143 = sbr.rel (%p140) target = $region28
      $region27: #{tpu_custom_call.1} parent=5 // pred_region
        %s144 = ssub.s32 %s11, 1
        %s145 = sand.u32 %s50, 1
        %s146 = scalar_lea.sflag [#allocation4], %s145
        %s147 = sand.u32 %s50, 1
        %s148 = smul.addr %s147, 128
        %s149 = scalar_lea.vmem [#allocation3], %s148
        // Predicated region
        $region29: #{tpu_custom_call.1} parent=27 // pred_check
          %p150 = pneg %p63
        $region30: #{tpu_custom_call.1} parent=27 // pred_check_branch
          %152 = sbr.rel (%p150) target = $region32
        $region31: #{tpu_custom_call.1} parent=27 // pred_region
          %154 = dma.done %s146, 2048
        $region32: #{tpu_custom_call.1} parent=27 // pred_fallthru
          _
        %p155 = scmp.lt.s32.totalorder %s16, 1
        %s156 = scalar_select %p155, %s16, 1
        %s157 = smul.addr %s156, 8
        %s158 = scalar_lea.vmem %s0, %s157
        %p159 = pneg %p37
        %p160 = pneg %p34
        %s161 = sand.u32 %s50, 1
        %s162 = scalar_lea.sflag [#allocation4], %s161
        %s163 = sand.u32 %s50, 1
        %s164 = smul.addr %s163, 128
        %s165 = scalar_lea.vmem [#allocation3], %s164
        %p166 = pneg %p63
        %p167 = pneg %p60
        %p168 = pneg %p89
        %p169 = pneg %p86
        %p170 = scmp.lt.s32.totalorder %s16, 1
        %s171 = scalar_select %p170, %s16, 1
        %s172 = smul.addr %s171, 8
        %s173 = scalar_lea.vmem %s2, %s172
        %p174 = scmp.lt.s32.totalorder %s16, 1
        %s175 = scalar_select %p174, %s16, 1
        %s176 = smul.addr %s175, 8
        %s177 = scalar_lea.vmem %s0, %s176
        %s178 = smul.u32 8, %s16
        %p179 = scmp.lt.s32.totalorder %s16, 1
        %s180 = scalar_select %p179, %s16, 1
        %s181 = smul.addr %s180, 8
        %s182 = scalar_lea.vmem %s2, %s181
        %v183 = vld [vmem:[%s149] sm:$0xff]
        %v184 = vld [vmem:[%s149 + $0x8] sm:$0xff]
        %v185 = vld [vmem:[%s149 + $0x10] sm:$0xff]
        %v186 = vld [vmem:[%s149 + $0x18] sm:$0xff]
        %v187 = vld [vmem:[%s149 + $0x20] sm:$0xff]
        %v188 = vld [vmem:[%s149 + $0x28] sm:$0xff]
        %v189 = vld [vmem:[%s149 + $0x30] sm:$0xff]
        %v190 = vld [vmem:[%s149 + $0x38] sm:$0xff]
        %v191 = vld [vmem:[%s149 + $0x40] sm:$0xff]
        %v192 = vld [vmem:[%s149 + $0x48] sm:$0xff]
        %v193 = vld [vmem:[%s149 + $0x50] sm:$0xff]
        %v194 = vld [vmem:[%s149 + $0x58] sm:$0xff]
        %v195 = vld [vmem:[%s149 + $0x60] sm:$0xff]
        %v196 = vld [vmem:[%s149 + $0x68] sm:$0xff]
        %v197 = vld [vmem:[%s149 + $0x70] sm:$0xff]
        %v198 = vld [vmem:[%s149 + $0x78] sm:$0xff]
        %vm199 = vcmask 261120
        %v200 = vsel %vm199, %v183, -inf
        %201 = vmax.xlane.f32.xlu0 %v200
        %v202 = vpop.xlane.xlu0 %201
        %v203 = vsel %vm199, %v184, -inf
        %204 = vmax.xlane.f32.xlu0 %v203
        %v205 = vpop.xlane.xlu0 %204
        %v206 = vsel %vm199, %v185, -inf
        %207 = vmax.xlane.f32.xlu0 %v206
        %v208 = vpop.xlane.xlu0 %207
        %v209 = vsel %vm199, %v186, -inf
        %210 = vmax.xlane.f32.xlu0 %v209
        %v211 = vpop.xlane.xlu0 %210
        %v212 = vsel %vm199, %v187, -inf
        %213 = vmax.xlane.f32.xlu0 %v212
        %v214 = vpop.xlane.xlu0 %213
        %v215 = vsel %vm199, %v188, -inf
        %216 = vmax.xlane.f32.xlu0 %v215
        %v217 = vpop.xlane.xlu0 %216
        %v218 = vsel %vm199, %v189, -inf
        %219 = vmax.xlane.f32.xlu0 %v218
        %v220 = vpop.xlane.xlu0 %219
        %v221 = vsel %vm199, %v190, -inf
        %222 = vmax.xlane.f32.xlu0 %v221
        %v223 = vpop.xlane.xlu0 %222
        %v224 = vsel %vm199, %v191, -inf
        %225 = vmax.xlane.f32.xlu0 %v224
        %v226 = vpop.xlane.xlu0 %225
        %v227 = vsel %vm199, %v192, -inf
        %228 = vmax.xlane.f32.xlu0 %v227
        %v229 = vpop.xlane.xlu0 %228
        %v230 = vsel %vm199, %v193, -inf
        %231 = vmax.xlane.f32.xlu0 %v230
        %v232 = vpop.xlane.xlu0 %231
        %v233 = vsel %vm199, %v194, -inf
        %234 = vmax.xlane.f32.xlu0 %v233
        %v235 = vpop.xlane.xlu0 %234
        %v236 = vsel %vm199, %v195, -inf
        %237 = vmax.xlane.f32.xlu0 %v236
        %v238 = vpop.xlane.xlu0 %237
        %v239 = vsel %vm199, %v196, -inf
        %240 = vmax.xlane.f32.xlu0 %v239
        %v241 = vpop.xlane.xlu0 %240
        %v242 = vsel %vm199, %v197, -inf
        %243 = vmax.xlane.f32.xlu0 %v242
        %v244 = vpop.xlane.xlu0 %243
        %v245 = vsel %vm199, %v198, -inf
        %246 = vmax.xlane.f32.xlu0 %v245
        %v247 = vpop.xlane.xlu0 %246
        %v248 = vsub.f32 %v183, %v202
        %v249 = vsub.f32 %v184, %v205
        %v250 = vsub.f32 %v185, %v208
        %v251 = vsub.f32 %v186, %v211
        %v252 = vsub.f32 %v187, %v214
        %v253 = vsub.f32 %v188, %v217
        %v254 = vsub.f32 %v189, %v220
        %v255 = vsub.f32 %v190, %v223
        %v256 = vsub.f32 %v191, %v226
        %v257 = vsub.f32 %v192, %v229
        %v258 = vsub.f32 %v193, %v232
        %v259 = vsub.f32 %v194, %v235
        %v260 = vsub.f32 %v195, %v238
        %v261 = vsub.f32 %v196, %v241
        %v262 = vsub.f32 %v197, %v244
        %v263 = vsub.f32 %v198, %v247
        %v264 = vmul.f32 %v248, 1.442695
        %v265 = vpow.pop %v264
        %v266 = vmul.f32 %v249, 1.442695
        %v267 = vpow.pop %v266
        %v268 = vmul.f32 %v250, 1.442695
        %v269 = vpow.pop %v268
        %v270 = vmul.f32 %v251, 1.442695
        %v271 = vpow.pop %v270
        %v272 = vmul.f32 %v252, 1.442695
        %v273 = vpow.pop %v272
        %v274 = vmul.f32 %v253, 1.442695
        %v275 = vpow.pop %v274
        %v276 = vmul.f32 %v254, 1.442695
        %v277 = vpow.pop %v276
        %v278 = vmul.f32 %v255, 1.442695
        %v279 = vpow.pop %v278
        %v280 = vmul.f32 %v256, 1.442695
        %v281 = vpow.pop %v280
        %v282 = vmul.f32 %v257, 1.442695
        %v283 = vpow.pop %v282
        %v284 = vmul.f32 %v258, 1.442695
        %v285 = vpow.pop %v284
        %v286 = vmul.f32 %v259, 1.442695
        %v287 = vpow.pop %v286
        %v288 = vmul.f32 %v260, 1.442695
        %v289 = vpow.pop %v288
        %v290 = vmul.f32 %v261, 1.442695
        %v291 = vpow.pop %v290
        %v292 = vmul.f32 %v262, 1.442695
        %v293 = vpow.pop %v292
        %v294 = vmul.f32 %v263, 1.442695
        %v295 = vpow.pop %v294
        %v296 = vsel %vm199, %v265, 0.0
        %297 = vadd.xlane.f32.xlu0 %v296
        %v298 = vpop.xlane.xlu0 %297
        %v299 = vsel %vm199, %v267, 0.0
        %300 = vadd.xlane.f32.xlu0 %v299
        %v301 = vpop.xlane.xlu0 %300
        %v302 = vsel %vm199, %v269, 0.0
        %303 = vadd.xlane.f32.xlu0 %v302
        %v304 = vpop.xlane.xlu0 %303
        %v305 = vsel %vm199, %v271, 0.0
        %306 = vadd.xlane.f32.xlu0 %v305
        %v307 = vpop.xlane.xlu0 %306
        %v308 = vsel %vm199, %v273, 0.0
        %309 = vadd.xlane.f32.xlu0 %v308
        %v310 = vpop.xlane.xlu0 %309
        %v311 = vsel %vm199, %v275, 0.0
        %312 = vadd.xlane.f32.xlu0 %v311
        %v313 = vpop.xlane.xlu0 %312
        %v314 = vsel %vm199, %v277, 0.0
        %315 = vadd.xlane.f32.xlu0 %v314
        %v316 = vpop.xlane.xlu0 %315
        %v317 = vsel %vm199, %v279, 0.0
        %318 = vadd.xlane.f32.xlu0 %v317
        %v319 = vpop.xlane.xlu0 %318
        %v320 = vsel %vm199, %v281, 0.0
        %321 = vadd.xlane.f32.xlu0 %v320
        %v322 = vpop.xlane.xlu0 %321
        %v323 = vsel %vm199, %v283, 0.0
        %324 = vadd.xlane.f32.xlu0 %v323
        %v325 = vpop.xlane.xlu0 %324
        %v326 = vsel %vm199, %v285, 0.0
        %327 = vadd.xlane.f32.xlu0 %v326
        %v328 = vpop.xlane.xlu0 %327
        %v329 = vsel %vm199, %v287, 0.0
        %330 = vadd.xlane.f32.xlu0 %v329
        %v331 = vpop.xlane.xlu0 %330
        %v332 = vsel %vm199, %v289, 0.0
        %333 = vadd.xlane.f32.xlu0 %v332
        %v334 = vpop.xlane.xlu0 %333
        %v335 = vsel %vm199, %v291, 0.0
        %336 = vadd.xlane.f32.xlu0 %v335
        %v337 = vpop.xlane.xlu0 %336
        %v338 = vsel %vm199, %v293, 0.0
        %339 = vadd.xlane.f32.xlu0 %v338
        %v340 = vpop.xlane.xlu0 %339
        %v341 = vsel %vm199, %v295, 0.0
        %342 = vadd.xlane.f32.xlu0 %v341
        %v343 = vpop.xlane.xlu0 %342
        %v344 = vlog2.pop %v298
        %v345 = vmul.f32 %v344, 0.6931472
        %v346 = vlog2.pop %v301
        %v347 = vmul.f32 %v346, 0.6931472
        %v348 = vlog2.pop %v304
        %v349 = vmul.f32 %v348, 0.6931472
        %v350 = vlog2.pop %v307
        %v351 = vmul.f32 %v350, 0.6931472
        %v352 = vlog2.pop %v310
        %v353 = vmul.f32 %v352, 0.6931472
        %v354 = vlog2.pop %v313
        %v355 = vmul.f32 %v354, 0.6931472
        %v356 = vlog2.pop %v316
        %v357 = vmul.f32 %v356, 0.6931472
        %v358 = vlog2.pop %v319
        %v359 = vmul.f32 %v358, 0.6931472
        %v360 = vlog2.pop %v322
        %v361 = vmul.f32 %v360, 0.6931472
        %v362 = vlog2.pop %v325
        %v363 = vmul.f32 %v362, 0.6931472
        %v364 = vlog2.pop %v328
        %v365 = vmul.f32 %v364, 0.6931472
        %v366 = vlog2.pop %v331
        %v367 = vmul.f32 %v366, 0.6931472
        %v368 = vlog2.pop %v334
        %v369 = vmul.f32 %v368, 0.6931472
        %v370 = vlog2.pop %v337
        %v371 = vmul.f32 %v370, 0.6931472
        %v372 = vlog2.pop %v340
        %v373 = vmul.f32 %v372, 0.6931472
        %v374 = vlog2.pop %v343
        %v375 = vmul.f32 %v374, 0.6931472
        %v376 = vadd.f32 %v202, %v345
        %v377 = vadd.f32 %v205, %v347
        %v378 = vadd.f32 %v208, %v349
        %v379 = vadd.f32 %v211, %v351
        %v380 = vadd.f32 %v214, %v353
        %v381 = vadd.f32 %v217, %v355
        %v382 = vadd.f32 %v220, %v357
        %v383 = vadd.f32 %v223, %v359
        %v384 = vadd.f32 %v226, %v361
        %v385 = vadd.f32 %v229, %v363
        %v386 = vadd.f32 %v232, %v365
        %v387 = vadd.f32 %v235, %v367
        %v388 = vadd.f32 %v238, %v369
        %v389 = vadd.f32 %v241, %v371
        %v390 = vadd.f32 %v244, %v373
        %v391 = vadd.f32 %v247, %v375
        %v392 = vsub.f32 %v183, %v376
        %v393 = vsub.f32 %v184, %v377
        %v394 = vsub.f32 %v185, %v378
        %v395 = vsub.f32 %v186, %v379
        %v396 = vsub.f32 %v187, %v380
        %v397 = vsub.f32 %v188, %v381
        %v398 = vsub.f32 %v189, %v382
        %v399 = vsub.f32 %v190, %v383
        %v400 = vsub.f32 %v191, %v384
        %v401 = vsub.f32 %v192, %v385
        %v402 = vsub.f32 %v193, %v386
        %v403 = vsub.f32 %v194, %v387
        %v404 = vsub.f32 %v195, %v388
        %v405 = vsub.f32 %v196, %v389
        %v406 = vsub.f32 %v197, %v390
        %v407 = vsub.f32 %v198, %v391
        %v408 = vlaneseq
        %v409 = vand.u32 %v408, 127
        %v410 = vlaneseq
        %v411 = vshrl.u32 %v410, 7
        %v412 = vmul.u32 %v411, 2
        %v413 = vadd.s32 %v412, 1
        %vm414 = vcmp.eq.s32.totalorder %v409, %v413
        %v415 = vsel %vm414, 1, 0
        %v416 = vcvt.s32.f32 %v415
        %v417 = vld [vmem:[%s177] sm:$0xff]
        %v418 = vcvt.s32.f32 %v417
        %vm419 = vcmask 64512
        %v421 = vsel %vm419, %v418, 0
        %423 = vmatpush.msra.mxu0 0.0
        %424 = vmatpush.msra.mxu0 0.0
        %425 = vmatpush.msra.mxu0 0.0
        %426 = vmatpush.msra.mxu0 0.0
        %427 = vmatpush.msra.mxu0 0.0
        %428 = vmatpush.msra.mxu0 0.0
        %429 = vmatpush.msra.mxu0 0.0
        %430 = vmatpush.msra.mxu0 0.0
        %431 = vmatpush.msra.mxu0 0.0
        %432 = vmatpush.msra.mxu0 0.0
        %433 = vmatpush.msra.mxu0 0.0
        %434 = vmatpush.msra.mxu0 0.0
        %435 = vmatpush.msra.mxu0 0.0
        %436 = vmatpush.msra.mxu0 0.0
        %437 = vmatpush.msra.mxu0 0.0
        %438 = vmatpush.msra.mxu0 %v416
        %439 = vmatmul.f32.gmra.mxu0 %v421
        %v440 = vpop.f32.mrf.mxu0
        %v441 = vadd.f32 0.0, %v440
        %442 = vdwg.mxu0
        %v443 = vcvt.f32.s32.to.zero.pseudo %v441
        %444 = vrot.lane.b32.xlu0 %v443, 2
        %v445 = vpop.permute.xlu0 %444
        %v446 = vand.u32 %v409, 1
        %vm447 = vcmp.eq.s32.totalorder %v446, 1
        %vm448 = vcmp.ge.s32.totalorder %v409, 3
        %vm449 = vmand %vm447, %vm448
        %vm450 = vcmp.lt.s32.totalorder %v409, 17
        %vm451 = vmand %vm449, %vm450
        %vm452 = vcmp.ne.s32.totalorder %v443, %v445
        %vm453 = vmand %vm451, %vm452
        %v454 = vadd.s32 %v411, 8
        %v455 = vadd.s32 %v411, 16
        %v456 = vadd.s32 %v411, 24
        %v457 = vperm.slane %v443, 0
        %vm458 = vcmp.eq.s32.totalorder %v411, %v457
        %vm459 = vcmp.eq.s32.totalorder %v454, %v457
        %vm460 = vcmp.eq.s32.totalorder %v455, %v457
        %vm461 = vcmp.eq.s32.totalorder %v456, %v457
        %v462 = vsel %vm458, 1, 0
        %v463 = vsel %vm459, 1, 0
        %v464 = vsel %vm460, 1, 0
        %v465 = vsel %vm461, 1, 0
        %v466 = vcvt.s32.f32 %v462
        %v467 = vcvt.s32.f32 %v463
        %v468 = vcvt.s32.f32 %v464
        %v469 = vcvt.s32.f32 %v465
        %v471 = vsel %vm199, %v392, 0
        %v474 = vsel %vm199, %v393, 0
        %476 = vmatpush.msra.mxu0 0.0
        %477 = vmatpush.msra.mxu0 0.0
        %478 = vmatpush.msra.mxu0 0.0
        %479 = vmatpush.msra.mxu0 0.0
        %480 = vmatpush.msra.mxu0 0.0
        %481 = vmatpush.msra.mxu0 0.0
        %482 = vmatpush.msra.mxu0 0.0
        %483 = vmatpush.msra.mxu0 0.0
        %484 = vmatpush.msra.mxu0 0.0
        %485 = vmatpush.msra.mxu0 0.0
        %486 = vmatpush.msra.mxu0 0.0
        %487 = vmatpush.msra.mxu0 0.0
        %488 = vmatpush.msra.mxu0 %v469
        %489 = vmatpush.msra.mxu0 %v468
        %490 = vmatpush.msra.mxu0 %v467
        %491 = vmatpush.msra.mxu0 %v466
        %492 = vmatmul.f32.gmra.mxu0 %v471
        %v493 = vpop.f32.mrf.mxu0
        %v494 = vadd.f32 0.0, %v493
        %495 = vmatmul.f32.gmra.mxu0 %v474
        %v496 = vpop.f32.mrf.mxu0
        %v497 = vadd.f32 0.0, %v496
        %498 = vdwg.mxu0
        %v499 = vsel %vm450, %v494, -1e+30
        %v500 = vsel %vm450, %v497, -1e+30
        %501 = vst [vmem:[#allocation2] sm:$0xff] %v499
        %502 = vst [vmem:[#allocation2 + $0x8] sm:$0xff] %v500
        %v503 = vperm.slane %v443, 1
        %vm504 = vcmp.eq.s32.totalorder %v411, %v503
        %vm505 = vcmp.eq.s32.totalorder %v454, %v503
        %vm506 = vcmp.eq.s32.totalorder %v455, %v503
        %vm507 = vcmp.eq.s32.totalorder %v456, %v503
        %v508 = vsel %vm504, 1, 0
        %v509 = vsel %vm505, 1, 0
        %v510 = vsel %vm506, 1, 0
        %v511 = vsel %vm507, 1, 0
        %v512 = vcvt.s32.f32 %v508
        %v513 = vcvt.s32.f32 %v509
        %v514 = vcvt.s32.f32 %v510
        %v515 = vcvt.s32.f32 %v511
        %v517 = vsel %vm199, %v394, 0
        %v520 = vsel %vm199, %v395, 0
        %522 = vmatpush.msra.mxu0 0.0
        %523 = vmatpush.msra.mxu0 0.0
        %524 = vmatpush.msra.mxu0 0.0
        %525 = vmatpush.msra.mxu0 0.0
        %526 = vmatpush.msra.mxu0 0.0
        %527 = vmatpush.msra.mxu0 0.0
        %528 = vmatpush.msra.mxu0 0.0
        %529 = vmatpush.msra.mxu0 0.0
        %530 = vmatpush.msra.mxu0 0.0
        %531 = vmatpush.msra.mxu0 0.0
        %532 = vmatpush.msra.mxu0 0.0
        %533 = vmatpush.msra.mxu0 0.0
        %534 = vmatpush.msra.mxu0 %v515
        %535 = vmatpush.msra.mxu0 %v514
        %536 = vmatpush.msra.mxu0 %v513
        %537 = vmatpush.msra.mxu0 %v512
        %538 = vmatmul.f32.gmra.mxu0 %v517
        %v539 = vpop.f32.mrf.mxu0
        %v540 = vadd.f32 0.0, %v539
        %541 = vmatmul.f32.gmra.mxu0 %v520
        %v542 = vpop.f32.mrf.mxu0
        %v543 = vadd.f32 0.0, %v542
        %544 = vdwg.mxu0
        %v545 = vsel %vm450, %v540, -1e+30
        %v546 = vsel %vm450, %v543, -1e+30
        %547 = vst [vmem:[#allocation2 + $0x10] sm:$0xff] %v545
        %548 = vst [vmem:[#allocation2 + $0x18] sm:$0xff] %v546
        %v549 = vperm.slane %v443, 2
        %vm550 = vcmp.eq.s32.totalorder %v411, %v549
        %vm551 = vcmp.eq.s32.totalorder %v454, %v549
        %vm552 = vcmp.eq.s32.totalorder %v455, %v549
        %vm553 = vcmp.eq.s32.totalorder %v456, %v549
        %v554 = vsel %vm550, 1, 0
        %v555 = vsel %vm551, 1, 0
        %v556 = vsel %vm552, 1, 0
        %v557 = vsel %vm553, 1, 0
        %v558 = vcvt.s32.f32 %v554
        %v559 = vcvt.s32.f32 %v555
        %v560 = vcvt.s32.f32 %v556
        %v561 = vcvt.s32.f32 %v557
        %v563 = vsel %vm199, %v396, 0
        %v566 = vsel %vm199, %v397, 0
        %568 = vmatpush.msra.mxu0 0.0
        %569 = vmatpush.msra.mxu0 0.0
        %570 = vmatpush.msra.mxu0 0.0
        %571 = vmatpush.msra.mxu0 0.0
        %572 = vmatpush.msra.mxu0 0.0
        %573 = vmatpush.msra.mxu0 0.0
        %574 = vmatpush.msra.mxu0 0.0
        %575 = vmatpush.msra.mxu0 0.0
        %576 = vmatpush.msra.mxu0 0.0
        %577 = vmatpush.msra.mxu0 0.0
        %578 = vmatpush.msra.mxu0 0.0
        %579 = vmatpush.msra.mxu0 0.0
        %580 = vmatpush.msra.mxu0 %v561
        %581 = vmatpush.msra.mxu0 %v560
        %582 = vmatpush.msra.mxu0 %v559
        %583 = vmatpush.msra.mxu0 %v558
        %584 = vmatmul.f32.gmra.mxu0 %v563
        %v585 = vpop.f32.mrf.mxu0
        %v586 = vadd.f32 0.0, %v585
        %587 = vmatmul.f32.gmra.mxu0 %v566
        %v588 = vpop.f32.mrf.mxu0
        %v589 = vadd.f32 0.0, %v588
        %590 = vdwg.mxu0
        %v591 = vsel %vm450, %v586, -1e+30
        %v592 = vsel %vm450, %v589, -1e+30
        %593 = vst [vmem:[#allocation2 + $0x20] sm:$0xff] %v591
        %594 = vst [vmem:[#allocation2 + $0x28] sm:$0xff] %v592
        %v595 = vperm.slane %v443, 3
        %vm596 = vcmp.eq.s32.totalorder %v411, %v595
        %vm597 = vcmp.eq.s32.totalorder %v454, %v595
        %vm598 = vcmp.eq.s32.totalorder %v455, %v595
        %vm599 = vcmp.eq.s32.totalorder %v456, %v595
        %v600 = vsel %vm596, 1, 0
        %v601 = vsel %vm597, 1, 0
        %v602 = vsel %vm598, 1, 0
        %v603 = vsel %vm599, 1, 0
        %v604 = vcvt.s32.f32 %v600
        %v605 = vcvt.s32.f32 %v601
        %v606 = vcvt.s32.f32 %v602
        %v607 = vcvt.s32.f32 %v603
        %v609 = vsel %vm199, %v398, 0
        %v612 = vsel %vm199, %v399, 0
        %614 = vmatpush.msra.mxu0 0.0
        %615 = vmatpush.msra.mxu0 0.0
        %616 = vmatpush.msra.mxu0 0.0
        %617 = vmatpush.msra.mxu0 0.0
        %618 = vmatpush.msra.mxu0 0.0
        %619 = vmatpush.msra.mxu0 0.0
        %620 = vmatpush.msra.mxu0 0.0
        %621 = vmatpush.msra.mxu0 0.0
        %622 = vmatpush.msra.mxu0 0.0
        %623 = vmatpush.msra.mxu0 0.0
        %624 = vmatpush.msra.mxu0 0.0
        %625 = vmatpush.msra.mxu0 0.0
        %626 = vmatpush.msra.mxu0 %v607
        %627 = vmatpush.msra.mxu0 %v606
        %628 = vmatpush.msra.mxu0 %v605
        %629 = vmatpush.msra.mxu0 %v604
        %630 = vmatmul.f32.gmra.mxu0 %v609
        %v631 = vpop.f32.mrf.mxu0
        %v632 = vadd.f32 0.0, %v631
        %633 = vmatmul.f32.gmra.mxu0 %v612
        %v634 = vpop.f32.mrf.mxu0
        %v635 = vadd.f32 0.0, %v634
        %636 = vdwg.mxu0
        %v637 = vsel %vm450, %v632, -1e+30
        %v638 = vsel %vm450, %v635, -1e+30
        %639 = vst [vmem:[#allocation2 + $0x30] sm:$0xff] %v637
        %640 = vst [vmem:[#allocation2 + $0x38] sm:$0xff] %v638
        %v641 = vperm.slane %v443, 4
        %vm642 = vcmp.eq.s32.totalorder %v411, %v641
        %vm643 = vcmp.eq.s32.totalorder %v454, %v641
        %vm644 = vcmp.eq.s32.totalorder %v455, %v641
        %vm645 = vcmp.eq.s32.totalorder %v456, %v641
        %v646 = vsel %vm642, 1, 0
        %v647 = vsel %vm643, 1, 0
        %v648 = vsel %vm644, 1, 0
        %v649 = vsel %vm645, 1, 0
        %v650 = vcvt.s32.f32 %v646
        %v651 = vcvt.s32.f32 %v647
        %v652 = vcvt.s32.f32 %v648
        %v653 = vcvt.s32.f32 %v649
        %v655 = vsel %vm199, %v400, 0
        %v658 = vsel %vm199, %v401, 0
        %660 = vmatpush.msra.mxu0 0.0
        %661 = vmatpush.msra.mxu0 0.0
        %662 = vmatpush.msra.mxu0 0.0
        %663 = vmatpush.msra.mxu0 0.0
        %664 = vmatpush.msra.mxu0 0.0
        %665 = vmatpush.msra.mxu0 0.0
        %666 = vmatpush.msra.mxu0 0.0
        %667 = vmatpush.msra.mxu0 0.0
        %668 = vmatpush.msra.mxu0 0.0
        %669 = vmatpush.msra.mxu0 0.0
        %670 = vmatpush.msra.mxu0 0.0
        %671 = vmatpush.msra.mxu0 0.0
        %672 = vmatpush.msra.mxu0 %v653
        %673 = vmatpush.msra.mxu0 %v652
        %674 = vmatpush.msra.mxu0 %v651
        %675 = vmatpush.msra.mxu0 %v650
        %676 = vmatmul.f32.gmra.mxu0 %v655
        %v677 = vpop.f32.mrf.mxu0
        %v678 = vadd.f32 0.0, %v677
        %679 = vmatmul.f32.gmra.mxu0 %v658
        %v680 = vpop.f32.mrf.mxu0
        %v681 = vadd.f32 0.0, %v680
        %682 = vdwg.mxu0
        %v683 = vsel %vm450, %v678, -1e+30
        %v684 = vsel %vm450, %v681, -1e+30
        %685 = vst [vmem:[#allocation2 + $0x40] sm:$0xff] %v683
        %686 = vst [vmem:[#allocation2 + $0x48] sm:$0xff] %v684
        %v687 = vperm.slane %v443, 5
        %vm688 = vcmp.eq.s32.totalorder %v411, %v687
        %vm689 = vcmp.eq.s32.totalorder %v454, %v687
        %vm690 = vcmp.eq.s32.totalorder %v455, %v687
        %vm691 = vcmp.eq.s32.totalorder %v456, %v687
        %v692 = vsel %vm688, 1, 0
        %v693 = vsel %vm689, 1, 0
        %v694 = vsel %vm690, 1, 0
        %v695 = vsel %vm691, 1, 0
        %v696 = vcvt.s32.f32 %v692
        %v697 = vcvt.s32.f32 %v693
        %v698 = vcvt.s32.f32 %v694
        %v699 = vcvt.s32.f32 %v695
        %v701 = vsel %vm199, %v402, 0
        %v704 = vsel %vm199, %v403, 0
        %706 = vmatpush.msra.mxu0 0.0
        %707 = vmatpush.msra.mxu0 0.0
        %708 = vmatpush.msra.mxu0 0.0
        %709 = vmatpush.msra.mxu0 0.0
        %710 = vmatpush.msra.mxu0 0.0
        %711 = vmatpush.msra.mxu0 0.0
        %712 = vmatpush.msra.mxu0 0.0
        %713 = vmatpush.msra.mxu0 0.0
        %714 = vmatpush.msra.mxu0 0.0
        %715 = vmatpush.msra.mxu0 0.0
        %716 = vmatpush.msra.mxu0 0.0
        %717 = vmatpush.msra.mxu0 0.0
        %718 = vmatpush.msra.mxu0 %v699
        %719 = vmatpush.msra.mxu0 %v698
        %720 = vmatpush.msra.mxu0 %v697
        %721 = vmatpush.msra.mxu0 %v696
        %722 = vmatmul.f32.gmra.mxu0 %v701
        %v723 = vpop.f32.mrf.mxu0
        %v724 = vadd.f32 0.0, %v723
        %725 = vmatmul.f32.gmra.mxu0 %v704
        %v726 = vpop.f32.mrf.mxu0
        %v727 = vadd.f32 0.0, %v726
        %728 = vdwg.mxu0
        %v729 = vsel %vm450, %v724, -1e+30
        %v730 = vsel %vm450, %v727, -1e+30
        %731 = vst [vmem:[#allocation2 + $0x50] sm:$0xff] %v729
        %732 = vst [vmem:[#allocation2 + $0x58] sm:$0xff] %v730
        %v733 = vperm.slane %v443, 6
        %vm734 = vcmp.eq.s32.totalorder %v411, %v733
        %vm735 = vcmp.eq.s32.totalorder %v454, %v733
        %vm736 = vcmp.eq.s32.totalorder %v455, %v733
        %vm737 = vcmp.eq.s32.totalorder %v456, %v733
        %v738 = vsel %vm734, 1, 0
        %v739 = vsel %vm735, 1, 0
        %v740 = vsel %vm736, 1, 0
        %v741 = vsel %vm737, 1, 0
        %v742 = vcvt.s32.f32 %v738
        %v743 = vcvt.s32.f32 %v739
        %v744 = vcvt.s32.f32 %v740
        %v745 = vcvt.s32.f32 %v741
        %v747 = vsel %vm199, %v404, 0
        %v750 = vsel %vm199, %v405, 0
        %752 = vmatpush.msra.mxu0 0.0
        %753 = vmatpush.msra.mxu0 0.0
        %754 = vmatpush.msra.mxu0 0.0
        %755 = vmatpush.msra.mxu0 0.0
        %756 = vmatpush.msra.mxu0 0.0
        %757 = vmatpush.msra.mxu0 0.0
        %758 = vmatpush.msra.mxu0 0.0
        %759 = vmatpush.msra.mxu0 0.0
        %760 = vmatpush.msra.mxu0 0.0
        %761 = vmatpush.msra.mxu0 0.0
        %762 = vmatpush.msra.mxu0 0.0
        %763 = vmatpush.msra.mxu0 0.0
        %764 = vmatpush.msra.mxu0 %v745
        %765 = vmatpush.msra.mxu0 %v744
        %766 = vmatpush.msra.mxu0 %v743
        %767 = vmatpush.msra.mxu0 %v742
        %768 = vmatmul.f32.gmra.mxu0 %v747
        %v769 = vpop.f32.mrf.mxu0
        %v770 = vadd.f32 0.0, %v769
        %771 = vmatmul.f32.gmra.mxu0 %v750
        %v772 = vpop.f32.mrf.mxu0
        %v773 = vadd.f32 0.0, %v772
        %774 = vdwg.mxu0
        %v775 = vsel %vm450, %v770, -1e+30
        %v776 = vsel %vm450, %v773, -1e+30
        %777 = vst [vmem:[#allocation2 + $0x60] sm:$0xff] %v775
        %778 = vst [vmem:[#allocation2 + $0x68] sm:$0xff] %v776
        %v779 = vperm.slane %v443, 7
        %vm780 = vcmp.eq.s32.totalorder %v411, %v779
        %vm781 = vcmp.eq.s32.totalorder %v454, %v779
        %vm782 = vcmp.eq.s32.totalorder %v455, %v779
        %vm783 = vcmp.eq.s32.totalorder %v456, %v779
        %v784 = vsel %vm780, 1, 0
        %v785 = vsel %vm781, 1, 0
        %v786 = vsel %vm782, 1, 0
        %v787 = vsel %vm783, 1, 0
        %v788 = vcvt.s32.f32 %v784
        %v789 = vcvt.s32.f32 %v785
        %v790 = vcvt.s32.f32 %v786
        %v791 = vcvt.s32.f32 %v787
        %v793 = vsel %vm199, %v406, 0
        %v796 = vsel %vm199, %v407, 0
        %798 = vmatpush.msra.mxu0 0.0
        %799 = vmatpush.msra.mxu0 0.0
        %800 = vmatpush.msra.mxu0 0.0
        %801 = vmatpush.msra.mxu0 0.0
        %802 = vmatpush.msra.mxu0 0.0
        %803 = vmatpush.msra.mxu0 0.0
        %804 = vmatpush.msra.mxu0 0.0
        %805 = vmatpush.msra.mxu0 0.0
        %806 = vmatpush.msra.mxu0 0.0
        %807 = vmatpush.msra.mxu0 0.0
        %808 = vmatpush.msra.mxu0 0.0
        %809 = vmatpush.msra.mxu0 0.0
        %810 = vmatpush.msra.mxu0 %v791
        %811 = vmatpush.msra.mxu0 %v790
        %812 = vmatpush.msra.mxu0 %v789
        %813 = vmatpush.msra.mxu0 %v788
        %814 = vmatmul.f32.gmra.mxu0 %v793
        %v815 = vpop.f32.mrf.mxu0
        %v816 = vadd.f32 0.0, %v815
        %817 = vmatmul.f32.gmra.mxu0 %v796
        %v818 = vpop.f32.mrf.mxu0
        %v819 = vadd.f32 0.0, %v818
        %820 = vdwg.mxu0
        %v821 = vsel %vm450, %v816, -1e+30
        %v822 = vsel %vm450, %v819, -1e+30
        %823 = vst [vmem:[#allocation2 + $0x70] sm:$0xff] %v821
        %824 = vst [vmem:[#allocation2 + $0x78] sm:$0xff] %v822
        %v825 = vld [vmem:[#allocation2] ss:$16 sm:$0x3]
        %v826 = vld [vmem:[#allocation2] ss:$16 sm:$0xc]
        %v827 = vor.u32 %v825, %v826
        %v828 = vld [vmem:[#allocation2] ss:$16 sm:$0x30]
        %v829 = vor.u32 %v827, %v828
        %v830 = vld [vmem:[#allocation2] ss:$16 sm:$0xc0]
        %v831 = vor.u32 %v829, %v830
        %vm832 = vcmp.lt.s32.totalorder %v409, 2
        %v833 = vsel %vm832, %v831, -1e+30
        %vm834 = vcmp.ge.s32.totalorder %v409, 1
        %835 = vrot.lane.b32.xlu0 %v833, 1
        %v836 = vpop.permute.xlu0 %835
        %v837 = vsel %vm834, %v836, -1e+30
        %838 = vrot.lane.b32.xlu0 %v833, 2
        %v839 = vpop.permute.xlu0 %838
        %v840 = vsel %vm453, %v839, -1e+30
        %v841 = vmax.f32 %v833, %v837
        %v842 = vmax.f32 %v841, %v840
        %v843 = vsub.f32 %v833, %v842
        %v844 = vmul.f32 %v843, 1.442695
        %v845 = vpow.pop %v844
        %v846 = vsub.f32 %v837, %v842
        %v847 = vmul.f32 %v846, 1.442695
        %v848 = vpow.pop %v847
        %v849 = vadd.f32 %v845, %v848
        %v850 = vsub.f32 %v840, %v842
        %v851 = vmul.f32 %v850, 1.442695
        %v852 = vpow.pop %v851
        %v853 = vadd.f32 %v849, %v852
        %v854 = vlog2.pop %v853
        %v855 = vmul.f32 %v854, 0.6931472
        %v856 = vadd.f32 %v842, %v855
        %s857 = scalar_lea.vmem [#allocation2], 1
        %v858 = vld [vmem:[%s857] ss:$16 sm:$0x3]
        %v859 = vld [vmem:[%s857] ss:$16 sm:$0xc]
        %v860 = vor.u32 %v858, %v859
        %v861 = vld [vmem:[%s857] ss:$16 sm:$0x30]
        %v862 = vor.u32 %v860, %v861
        %v863 = vld [vmem:[%s857] ss:$16 sm:$0xc0]
        %v864 = vor.u32 %v862, %v863
        %v865 = vadd.f32 %v864, %v856
        %v866 = vsel %vm450, %v865, -1e+30
        %867 = vrot.lane.b32.xlu0 %v866, 1
        %v868 = vpop.permute.xlu0 %867
        %v869 = vsel %vm834, %v868, -1e+30
        %870 = vrot.lane.b32.xlu0 %v866, 2
        %v871 = vpop.permute.xlu0 %870
        %v872 = vsel %vm453, %v871, -1e+30
        %v873 = vmax.f32 %v866, %v869
        %v874 = vmax.f32 %v873, %v872
        %v875 = vsub.f32 %v866, %v874
        %v876 = vmul.f32 %v875, 1.442695
        %v877 = vpow.pop %v876
        %v878 = vsub.f32 %v869, %v874
        %v879 = vmul.f32 %v878, 1.442695
        %v880 = vpow.pop %v879
        %v881 = vadd.f32 %v877, %v880
        %v882 = vsub.f32 %v872, %v874
        %v883 = vmul.f32 %v882, 1.442695
        %v884 = vpow.pop %v883
        %v885 = vadd.f32 %v881, %v884
        %v886 = vlog2.pop %v885
        %v887 = vmul.f32 %v886, 0.6931472
        %v888 = vadd.f32 %v874, %v887
        %s889 = scalar_lea.vmem [#allocation2], 2
        %v890 = vld [vmem:[%s889] ss:$16 sm:$0x3]
        %v891 = vld [vmem:[%s889] ss:$16 sm:$0xc]
        %v892 = vor.u32 %v890, %v891
        %v893 = vld [vmem:[%s889] ss:$16 sm:$0x30]
        %v894 = vor.u32 %v892, %v893
        %v895 = vld [vmem:[%s889] ss:$16 sm:$0xc0]
        %v896 = vor.u32 %v894, %v895
        %v897 = vadd.f32 %v896, %v888
        %v898 = vsel %vm450, %v897, -1e+30
        %899 = vrot.lane.b32.xlu0 %v898, 1
        %v900 = vpop.permute.xlu0 %899
        %v901 = vsel %vm834, %v900, -1e+30
        %902 = vrot.lane.b32.xlu0 %v898, 2
        %v903 = vpop.permute.xlu0 %902
        %v904 = vsel %vm453, %v903, -1e+30
        %v905 = vmax.f32 %v898, %v901
        %v906 = vmax.f32 %v905, %v904
        %v907 = vsub.f32 %v898, %v906
        %v908 = vmul.f32 %v907, 1.442695
        %v909 = vpow.pop %v908
        %v910 = vsub.f32 %v901, %v906
        %v911 = vmul.f32 %v910, 1.442695
        %v912 = vpow.pop %v911
        %v913 = vadd.f32 %v909, %v912
        %v914 = vsub.f32 %v904, %v906
        %v915 = vmul.f32 %v914, 1.442695
        %v916 = vpow.pop %v915
        %v917 = vadd.f32 %v913, %v916
        %v918 = vlog2.pop %v917
        %v919 = vmul.f32 %v918, 0.6931472
        %v920 = vadd.f32 %v906, %v919
        %s921 = scalar_lea.vmem [#allocation2], 3
        %v922 = vld [vmem:[%s921] ss:$16 sm:$0x3]
        %v923 = vld [vmem:[%s921] ss:$16 sm:$0xc]
        %v924 = vor.u32 %v922, %v923
        %v925 = vld [vmem:[%s921] ss:$16 sm:$0x30]
        %v926 = vor.u32 %v924, %v925
        %v927 = vld [vmem:[%s921] ss:$16 sm:$0xc0]
        %v928 = vor.u32 %v926, %v927
        %v929 = vadd.f32 %v928, %v920
        %v930 = vsel %vm450, %v929, -1e+30
        %931 = vrot.lane.b32.xlu0 %v930, 1
        %v932 = vpop.permute.xlu0 %931
        %v933 = vsel %vm834, %v932, -1e+30
        %934 = vrot.lane.b32.xlu0 %v930, 2
        %v935 = vpop.permute.xlu0 %934
        %v936 = vsel %vm453, %v935, -1e+30
        %v937 = vmax.f32 %v930, %v933
        %v938 = vmax.f32 %v937, %v936
        %v939 = vsub.f32 %v930, %v938
        %v940 = vmul.f32 %v939, 1.442695
        %v941 = vpow.pop %v940
        %v942 = vsub.f32 %v933, %v938
        %v943 = vmul.f32 %v942, 1.442695
        %v944 = vpow.pop %v943
        %v945 = vadd.f32 %v941, %v944
        %v946 = vsub.f32 %v936, %v938
        %v947 = vmul.f32 %v946, 1.442695
        %v948 = vpow.pop %v947
        %v949 = vadd.f32 %v945, %v948
        %v950 = vlog2.pop %v949
        %v951 = vmul.f32 %v950, 0.6931472
        %v952 = vadd.f32 %v938, %v951
        %s953 = scalar_lea.vmem [#allocation2], 4
        %v954 = vld [vmem:[%s953] ss:$16 sm:$0x3]
        %v955 = vld [vmem:[%s953] ss:$16 sm:$0xc]
        %v956 = vor.u32 %v954, %v955
        %v957 = vld [vmem:[%s953] ss:$16 sm:$0x30]
        %v958 = vor.u32 %v956, %v957
        %v959 = vld [vmem:[%s953] ss:$16 sm:$0xc0]
        %v960 = vor.u32 %v958, %v959
        %v961 = vadd.f32 %v960, %v952
        %v962 = vsel %vm450, %v961, -1e+30
        %963 = vrot.lane.b32.xlu0 %v962, 1
        %v964 = vpop.permute.xlu0 %963
        %v965 = vsel %vm834, %v964, -1e+30
        %966 = vrot.lane.b32.xlu0 %v962, 2
        %v967 = vpop.permute.xlu0 %966
        %v968 = vsel %vm453, %v967, -1e+30
        %v969 = vmax.f32 %v962, %v965
        %v970 = vmax.f32 %v969, %v968
        %v971 = vsub.f32 %v962, %v970
        %v972 = vmul.f32 %v971, 1.442695
        %v973 = vpow.pop %v972
        %v974 = vsub.f32 %v965, %v970
        %v975 = vmul.f32 %v974, 1.442695
        %v976 = vpow.pop %v975
        %v977 = vadd.f32 %v973, %v976
        %v978 = vsub.f32 %v968, %v970
        %v979 = vmul.f32 %v978, 1.442695
        %v980 = vpow.pop %v979
        %v981 = vadd.f32 %v977, %v980
        %v982 = vlog2.pop %v981
        %v983 = vmul.f32 %v982, 0.6931472
        %v984 = vadd.f32 %v970, %v983
        %s985 = scalar_lea.vmem [#allocation2], 5
        %v986 = vld [vmem:[%s985] ss:$16 sm:$0x3]
        %v987 = vld [vmem:[%s985] ss:$16 sm:$0xc]
        %v988 = vor.u32 %v986, %v987
        %v989 = vld [vmem:[%s985] ss:$16 sm:$0x30]
        %v990 = vor.u32 %v988, %v989
        %v991 = vld [vmem:[%s985] ss:$16 sm:$0xc0]
        %v992 = vor.u32 %v990, %v991
        %v993 = vadd.f32 %v992, %v984
        %v994 = vsel %vm450, %v993, -1e+30
        %995 = vrot.lane.b32.xlu0 %v994, 1
        %v996 = vpop.permute.xlu0 %995
        %v997 = vsel %vm834, %v996, -1e+30
        %998 = vrot.lane.b32.xlu0 %v994, 2
        %v999 = vpop.permute.xlu0 %998
        %v1000 = vsel %vm453, %v999, -1e+30
        %v1001 = vmax.f32 %v994, %v997
        %v1002 = vmax.f32 %v1001, %v1000
        %v1003 = vsub.f32 %v994, %v1002
        %v1004 = vmul.f32 %v1003, 1.442695
        %v1005 = vpow.pop %v1004
        %v1006 = vsub.f32 %v997, %v1002
        %v1007 = vmul.f32 %v1006, 1.442695
        %v1008 = vpow.pop %v1007
        %v1009 = vadd.f32 %v1005, %v1008
        %v1010 = vsub.f32 %v1000, %v1002
        %v1011 = vmul.f32 %v1010, 1.442695
        %v1012 = vpow.pop %v1011
        %v1013 = vadd.f32 %v1009, %v1012
        %v1014 = vlog2.pop %v1013
        %v1015 = vmul.f32 %v1014, 0.6931472
        %v1016 = vadd.f32 %v1002, %v1015
        %s1017 = scalar_lea.vmem [#allocation2], 6
        %v1018 = vld [vmem:[%s1017] ss:$16 sm:$0x3]
        %v1019 = vld [vmem:[%s1017] ss:$16 sm:$0xc]
        %v1020 = vor.u32 %v1018, %v1019
        %v1021 = vld [vmem:[%s1017] ss:$16 sm:$0x30]
        %v1022 = vor.u32 %v1020, %v1021
        %v1023 = vld [vmem:[%s1017] ss:$16 sm:$0xc0]
        %v1024 = vor.u32 %v1022, %v1023
        %v1025 = vadd.f32 %v1024, %v1016
        %v1026 = vsel %vm450, %v1025, -1e+30
        %1027 = vrot.lane.b32.xlu0 %v1026, 1
        %v1028 = vpop.permute.xlu0 %1027
        %v1029 = vsel %vm834, %v1028, -1e+30
        %1030 = vrot.lane.b32.xlu0 %v1026, 2
        %v1031 = vpop.permute.xlu0 %1030
        %v1032 = vsel %vm453, %v1031, -1e+30
        %v1033 = vmax.f32 %v1026, %v1029
        %v1034 = vmax.f32 %v1033, %v1032
        %v1035 = vsub.f32 %v1026, %v1034
        %v1036 = vmul.f32 %v1035, 1.442695
        %v1037 = vpow.pop %v1036
        %v1038 = vsub.f32 %v1029, %v1034
        %v1039 = vmul.f32 %v1038, 1.442695
        %v1040 = vpow.pop %v1039
        %v1041 = vadd.f32 %v1037, %v1040
        %v1042 = vsub.f32 %v1032, %v1034
        %v1043 = vmul.f32 %v1042, 1.442695
        %v1044 = vpow.pop %v1043
        %v1045 = vadd.f32 %v1041, %v1044
        %v1046 = vlog2.pop %v1045
        %v1047 = vmul.f32 %v1046, 0.6931472
        %v1048 = vadd.f32 %v1034, %v1047
        %s1049 = scalar_lea.vmem [#allocation2], 7
        %v1050 = vld [vmem:[%s1049] ss:$16 sm:$0x3]
        %v1051 = vld [vmem:[%s1049] ss:$16 sm:$0xc]
        %v1052 = vor.u32 %v1050, %v1051
        %v1053 = vld [vmem:[%s1049] ss:$16 sm:$0x30]
        %v1054 = vor.u32 %v1052, %v1053
        %v1055 = vld [vmem:[%s1049] ss:$16 sm:$0xc0]
        %v1056 = vor.u32 %v1054, %v1055
        %v1057 = vadd.f32 %v1056, %v1048
        %v1058 = vsel %vm450, %v1057, -1e+30
        %1059 = vrot.lane.b32.xlu0 %v1058, 1
        %v1060 = vpop.permute.xlu0 %1059
        %v1061 = vsel %vm834, %v1060, -1e+30
        %1062 = vrot.lane.b32.xlu0 %v1058, 2
        %v1063 = vpop.permute.xlu0 %1062
        %v1064 = vsel %vm453, %v1063, -1e+30
        %v1065 = vmax.f32 %v1058, %v1061
        %v1066 = vmax.f32 %v1065, %v1064
        %v1067 = vsub.f32 %v1058, %v1066
        %v1068 = vmul.f32 %v1067, 1.442695
        %v1069 = vpow.pop %v1068
        %v1070 = vsub.f32 %v1061, %v1066
        %v1071 = vmul.f32 %v1070, 1.442695
        %v1072 = vpow.pop %v1071
        %v1073 = vadd.f32 %v1069, %v1072
        %v1074 = vsub.f32 %v1064, %v1066
        %v1075 = vmul.f32 %v1074, 1.442695
        %v1076 = vpow.pop %v1075
        %v1077 = vadd.f32 %v1073, %v1076
        %v1078 = vlog2.pop %v1077
        %v1079 = vmul.f32 %v1078, 0.6931472
        %v1080 = vadd.f32 %v1066, %v1079
        %s1081 = scalar_lea.vmem [#allocation2], 8
        %v1082 = vld [vmem:[%s1081] ss:$16 sm:$0x3]
        %v1083 = vld [vmem:[%s1081] ss:$16 sm:$0xc]
        %v1084 = vor.u32 %v1082, %v1083
        %v1085 = vld [vmem:[%s1081] ss:$16 sm:$0x30]
        %v1086 = vor.u32 %v1084, %v1085
        %v1087 = vld [vmem:[%s1081] ss:$16 sm:$0xc0]
        %v1088 = vor.u32 %v1086, %v1087
        %v1089 = vadd.f32 %v1088, %v1080
        %v1090 = vsel %vm450, %v1089, -1e+30
        %1091 = vrot.lane.b32.xlu0 %v1090, 1
        %v1092 = vpop.permute.xlu0 %1091
        %v1093 = vsel %vm834, %v1092, -1e+30
        %1094 = vrot.lane.b32.xlu0 %v1090, 2
        %v1095 = vpop.permute.xlu0 %1094
        %v1096 = vsel %vm453, %v1095, -1e+30
        %v1097 = vmax.f32 %v1090, %v1093
        %v1098 = vmax.f32 %v1097, %v1096
        %v1099 = vsub.f32 %v1090, %v1098
        %v1100 = vmul.f32 %v1099, 1.442695
        %v1101 = vpow.pop %v1100
        %v1102 = vsub.f32 %v1093, %v1098
        %v1103 = vmul.f32 %v1102, 1.442695
        %v1104 = vpow.pop %v1103
        %v1105 = vadd.f32 %v1101, %v1104
        %v1106 = vsub.f32 %v1096, %v1098
        %v1107 = vmul.f32 %v1106, 1.442695
        %v1108 = vpow.pop %v1107
        %v1109 = vadd.f32 %v1105, %v1108
        %v1110 = vlog2.pop %v1109
        %v1111 = vmul.f32 %v1110, 0.6931472
        %v1112 = vadd.f32 %v1098, %v1111
        %s1113 = scalar_lea.vmem [#allocation2], 9
        %v1114 = vld [vmem:[%s1113] ss:$16 sm:$0x3]
        %v1115 = vld [vmem:[%s1113] ss:$16 sm:$0xc]
        %v1116 = vor.u32 %v1114, %v1115
        %v1117 = vld [vmem:[%s1113] ss:$16 sm:$0x30]
        %v1118 = vor.u32 %v1116, %v1117
        %v1119 = vld [vmem:[%s1113] ss:$16 sm:$0xc0]
        %v1120 = vor.u32 %v1118, %v1119
        %v1121 = vadd.f32 %v1120, %v1112
        %v1122 = vsel %vm450, %v1121, -1e+30
        %1123 = vrot.lane.b32.xlu0 %v1122, 1
        %v1124 = vpop.permute.xlu0 %1123
        %v1125 = vsel %vm834, %v1124, -1e+30
        %1126 = vrot.lane.b32.xlu0 %v1122, 2
        %v1127 = vpop.permute.xlu0 %1126
        %v1128 = vsel %vm453, %v1127, -1e+30
        %v1129 = vmax.f32 %v1122, %v1125
        %v1130 = vmax.f32 %v1129, %v1128
        %v1131 = vsub.f32 %v1122, %v1130
        %v1132 = vmul.f32 %v1131, 1.442695
        %v1133 = vpow.pop %v1132
        %v1134 = vsub.f32 %v1125, %v1130
        %v1135 = vmul.f32 %v1134, 1.442695
        %v1136 = vpow.pop %v1135
        %v1137 = vadd.f32 %v1133, %v1136
        %v1138 = vsub.f32 %v1128, %v1130
        %v1139 = vmul.f32 %v1138, 1.442695
        %v1140 = vpow.pop %v1139
        %v1141 = vadd.f32 %v1137, %v1140
        %v1142 = vlog2.pop %v1141
        %v1143 = vmul.f32 %v1142, 0.6931472
        %v1144 = vadd.f32 %v1130, %v1143
        %s1145 = scalar_lea.vmem [#allocation2], 10
        %v1146 = vld [vmem:[%s1145] ss:$16 sm:$0x3]
        %v1147 = vld [vmem:[%s1145] ss:$16 sm:$0xc]
        %v1148 = vor.u32 %v1146, %v1147
        %v1149 = vld [vmem:[%s1145] ss:$16 sm:$0x30]
        %v1150 = vor.u32 %v1148, %v1149
        %v1151 = vld [vmem:[%s1145] ss:$16 sm:$0xc0]
        %v1152 = vor.u32 %v1150, %v1151
        %v1153 = vadd.f32 %v1152, %v1144
        %v1154 = vsel %vm450, %v1153, -1e+30
        %1155 = vrot.lane.b32.xlu0 %v1154, 1
        %v1156 = vpop.permute.xlu0 %1155
        %v1157 = vsel %vm834, %v1156, -1e+30
        %1158 = vrot.lane.b32.xlu0 %v1154, 2
        %v1159 = vpop.permute.xlu0 %1158
        %v1160 = vsel %vm453, %v1159, -1e+30
        %v1161 = vmax.f32 %v1154, %v1157
        %v1162 = vmax.f32 %v1161, %v1160
        %v1163 = vsub.f32 %v1154, %v1162
        %v1164 = vmul.f32 %v1163, 1.442695
        %v1165 = vpow.pop %v1164
        %v1166 = vsub.f32 %v1157, %v1162
        %v1167 = vmul.f32 %v1166, 1.442695
        %v1168 = vpow.pop %v1167
        %v1169 = vadd.f32 %v1165, %v1168
        %v1170 = vsub.f32 %v1160, %v1162
        %v1171 = vmul.f32 %v1170, 1.442695
        %v1172 = vpow.pop %v1171
        %v1173 = vadd.f32 %v1169, %v1172
        %v1174 = vlog2.pop %v1173
        %v1175 = vmul.f32 %v1174, 0.6931472
        %v1176 = vadd.f32 %v1162, %v1175
        %s1177 = scalar_lea.vmem [#allocation2], 11
        %v1178 = vld [vmem:[%s1177] ss:$16 sm:$0x3]
        %v1179 = vld [vmem:[%s1177] ss:$16 sm:$0xc]
        %v1180 = vor.u32 %v1178, %v1179
        %v1181 = vld [vmem:[%s1177] ss:$16 sm:$0x30]
        %v1182 = vor.u32 %v1180, %v1181
        %v1183 = vld [vmem:[%s1177] ss:$16 sm:$0xc0]
        %v1184 = vor.u32 %v1182, %v1183
        %v1185 = vadd.f32 %v1184, %v1176
        %v1186 = vsel %vm450, %v1185, -1e+30
        %1187 = vrot.lane.b32.xlu0 %v1186, 1
        %v1188 = vpop.permute.xlu0 %1187
        %v1189 = vsel %vm834, %v1188, -1e+30
        %1190 = vrot.lane.b32.xlu0 %v1186, 2
        %v1191 = vpop.permute.xlu0 %1190
        %v1192 = vsel %vm453, %v1191, -1e+30
        %v1193 = vmax.f32 %v1186, %v1189
        %v1194 = vmax.f32 %v1193, %v1192
        %v1195 = vsub.f32 %v1186, %v1194
        %v1196 = vmul.f32 %v1195, 1.442695
        %v1197 = vpow.pop %v1196
        %v1198 = vsub.f32 %v1189, %v1194
        %v1199 = vmul.f32 %v1198, 1.442695
        %v1200 = vpow.pop %v1199
        %v1201 = vadd.f32 %v1197, %v1200
        %v1202 = vsub.f32 %v1192, %v1194
        %v1203 = vmul.f32 %v1202, 1.442695
        %v1204 = vpow.pop %v1203
        %v1205 = vadd.f32 %v1201, %v1204
        %v1206 = vlog2.pop %v1205
        %v1207 = vmul.f32 %v1206, 0.6931472
        %v1208 = vadd.f32 %v1194, %v1207
        %s1209 = scalar_lea.vmem [#allocation2], 12
        %v1210 = vld [vmem:[%s1209] ss:$16 sm:$0x3]
        %v1211 = vld [vmem:[%s1209] ss:$16 sm:$0xc]
        %v1212 = vor.u32 %v1210, %v1211
        %v1213 = vld [vmem:[%s1209] ss:$16 sm:$0x30]
        %v1214 = vor.u32 %v1212, %v1213
        %v1215 = vld [vmem:[%s1209] ss:$16 sm:$0xc0]
        %v1216 = vor.u32 %v1214, %v1215
        %v1217 = vadd.f32 %v1216, %v1208
        %v1218 = vsel %vm450, %v1217, -1e+30
        %1219 = vrot.lane.b32.xlu0 %v1218, 1
        %v1220 = vpop.permute.xlu0 %1219
        %v1221 = vsel %vm834, %v1220, -1e+30
        %1222 = vrot.lane.b32.xlu0 %v1218, 2
        %v1223 = vpop.permute.xlu0 %1222
        %v1224 = vsel %vm453, %v1223, -1e+30
        %v1225 = vmax.f32 %v1218, %v1221
        %v1226 = vmax.f32 %v1225, %v1224
        %v1227 = vsub.f32 %v1218, %v1226
        %v1228 = vmul.f32 %v1227, 1.442695
        %v1229 = vpow.pop %v1228
        %v1230 = vsub.f32 %v1221, %v1226
        %v1231 = vmul.f32 %v1230, 1.442695
        %v1232 = vpow.pop %v1231
        %v1233 = vadd.f32 %v1229, %v1232
        %v1234 = vsub.f32 %v1224, %v1226
        %v1235 = vmul.f32 %v1234, 1.442695
        %v1236 = vpow.pop %v1235
        %v1237 = vadd.f32 %v1233, %v1236
        %v1238 = vlog2.pop %v1237
        %v1239 = vmul.f32 %v1238, 0.6931472
        %v1240 = vadd.f32 %v1226, %v1239
        %s1241 = scalar_lea.vmem [#allocation2], 13
        %v1242 = vld [vmem:[%s1241] ss:$16 sm:$0x3]
        %v1243 = vld [vmem:[%s1241] ss:$16 sm:$0xc]
        %v1244 = vor.u32 %v1242, %v1243
        %v1245 = vld [vmem:[%s1241] ss:$16 sm:$0x30]
        %v1246 = vor.u32 %v1244, %v1245
        %v1247 = vld [vmem:[%s1241] ss:$16 sm:$0xc0]
        %v1248 = vor.u32 %v1246, %v1247
        %v1249 = vadd.f32 %v1248, %v1240
        %v1250 = vsel %vm450, %v1249, -1e+30
        %1251 = vrot.lane.b32.xlu0 %v1250, 1
        %v1252 = vpop.permute.xlu0 %1251
        %v1253 = vsel %vm834, %v1252, -1e+30
        %1254 = vrot.lane.b32.xlu0 %v1250, 2
        %v1255 = vpop.permute.xlu0 %1254
        %v1256 = vsel %vm453, %v1255, -1e+30
        %v1257 = vmax.f32 %v1250, %v1253
        %v1258 = vmax.f32 %v1257, %v1256
        %v1259 = vsub.f32 %v1250, %v1258
        %v1260 = vmul.f32 %v1259, 1.442695
        %v1261 = vpow.pop %v1260
        %v1262 = vsub.f32 %v1253, %v1258
        %v1263 = vmul.f32 %v1262, 1.442695
        %v1264 = vpow.pop %v1263
        %v1265 = vadd.f32 %v1261, %v1264
        %v1266 = vsub.f32 %v1256, %v1258
        %v1267 = vmul.f32 %v1266, 1.442695
        %v1268 = vpow.pop %v1267
        %v1269 = vadd.f32 %v1265, %v1268
        %v1270 = vlog2.pop %v1269
        %v1271 = vmul.f32 %v1270, 0.6931472
        %v1272 = vadd.f32 %v1258, %v1271
        %s1273 = scalar_lea.vmem [#allocation2], 14
        %v1274 = vld [vmem:[%s1273] ss:$16 sm:$0x3]
        %v1275 = vld [vmem:[%s1273] ss:$16 sm:$0xc]
        %v1276 = vor.u32 %v1274, %v1275
        %v1277 = vld [vmem:[%s1273] ss:$16 sm:$0x30]
        %v1278 = vor.u32 %v1276, %v1277
        %v1279 = vld [vmem:[%s1273] ss:$16 sm:$0xc0]
        %v1280 = vor.u32 %v1278, %v1279
        %v1281 = vadd.f32 %v1280, %v1272
        %v1282 = vsel %vm450, %v1281, -1e+30
        %1283 = vrot.lane.b32.xlu0 %v1282, 1
        %v1284 = vpop.permute.xlu0 %1283
        %v1285 = vsel %vm834, %v1284, -1e+30
        %1286 = vrot.lane.b32.xlu0 %v1282, 2
        %v1287 = vpop.permute.xlu0 %1286
        %v1288 = vsel %vm453, %v1287, -1e+30
        %v1289 = vmax.f32 %v1282, %v1285
        %v1290 = vmax.f32 %v1289, %v1288
        %v1291 = vsub.f32 %v1282, %v1290
        %v1292 = vmul.f32 %v1291, 1.442695
        %v1293 = vpow.pop %v1292
        %v1294 = vsub.f32 %v1285, %v1290
        %v1295 = vmul.f32 %v1294, 1.442695
        %v1296 = vpow.pop %v1295
        %v1297 = vadd.f32 %v1293, %v1296
        %v1298 = vsub.f32 %v1288, %v1290
        %v1299 = vmul.f32 %v1298, 1.442695
        %v1300 = vpow.pop %v1299
        %v1301 = vadd.f32 %v1297, %v1300
        %v1302 = vlog2.pop %v1301
        %v1303 = vmul.f32 %v1302, 0.6931472
        %v1304 = vadd.f32 %v1290, %v1303
        %s1305 = scalar_lea.vmem [#allocation2], 15
        %v1306 = vld [vmem:[%s1305] ss:$16 sm:$0x3]
        %v1307 = vld [vmem:[%s1305] ss:$16 sm:$0xc]
        %v1308 = vor.u32 %v1306, %v1307
        %v1309 = vld [vmem:[%s1305] ss:$16 sm:$0x30]
        %v1310 = vor.u32 %v1308, %v1309
        %v1311 = vld [vmem:[%s1305] ss:$16 sm:$0xc0]
        %v1312 = vor.u32 %v1310, %v1311
        %v1313 = vadd.f32 %v1312, %v1304
        %v1314 = vsel %vm450, %v1313, -1e+30
        %vm1315 = vcmp.eq.s32.totalorder %v409, 16
        %vm1316 = vcmp.eq.s32.totalorder %v409, 15
        %vm1317 = vmor %vm1315, %vm1316
        %v1318 = vsel %vm1317, %v1314, -1e+30
        %1319 = vmax.xlane.f32.xlu0 %v1318
        %v1320 = vpop.xlane.xlu0 %1319
        %v1321 = vsub.f32 %v1318, %v1320
        %v1322 = vmul.f32 %v1321, 1.442695
        %v1323 = vpow.pop %v1322
        %1324 = vadd.xlane.f32.xlu0 %v1323
        %v1325 = vpop.xlane.xlu0 %1324
        %v1326 = vlog2.pop %v1325
        %v1327 = vmul.f32 %v1326, 0.6931472
        %v1328 = vadd.f32 %v1320, %v1327
        %v1329 = vsub.f32 0.0, %v1328
        %vm1330 = vcmask 7168
        %1331 = vst.msk [vmem:[%s182] sm:$0xff] %vm1330, %v1329
        %p1332 = scmp.lt.s32.totalorder %s16, 1
        %s1333 = scalar_select %p1332, %s16, 1
        %s1334 = smul.addr %s1333, 8
        %s1335 = scalar_lea.vmem %s2, %s1334
        // Predicated region
        $region33: #{tpu_custom_call.1} parent=27 // pred_check
          %p1336 = pneg %p86
        $region34: #{tpu_custom_call.1} parent=27 // pred_check_branch
          %1338 = sbr.rel (%p1336) target = $region36
        $region35: #{tpu_custom_call.1} parent=27 // pred_region
          _
        $region36: #{tpu_custom_call.1} parent=27 // pred_fallthru
          _
      $region28: #{tpu_custom_call.1} parent=5 // pred_fallthru
        _
      %p1339 = scmp.le.s32.totalorder 2, %s11
      // Predicated region
      $region37: #{tpu_custom_call.1} parent=5 // pred_check
        %p1340 = pneg %p1339
      $region38: #{tpu_custom_call.1} parent=5 // pred_check_branch
        %1342 = sbr.rel (%p1340) target = $region40
      $region39: #{tpu_custom_call.1} parent=5 // pred_region
        %s1343 = ssub.s32 %s11, 2
        // Predicated region
        $region41: #{tpu_custom_call.1} parent=39 // pred_check
          %p1344 = pneg %p92
        $region42: #{tpu_custom_call.1} parent=39 // pred_check_branch
          %1346 = sbr.rel (%p1344) target = $region44
        $region43: #{tpu_custom_call.1} parent=39 // pred_region
          %p1347 = scmp.lt.s32.totalorder %s17, 1
          %s1348 = scalar_select %p1347, %s17, 1
          %s1349 = smul.addr %s1348, 8
          %s1350 = scalar_lea.vmem %s2, %s1349
        $region44: #{tpu_custom_call.1} parent=39 // pred_fallthru
          _
      $region40: #{tpu_custom_call.1} parent=5 // pred_fallthru
        _
    $region6: #{tpu_custom_call.1} parent=1 // loop_footer
      %s15 = sadd.s32 1, %s11
    $region7: #{tpu_custom_call.1} parent=1 // loop_footer_branch
      %10 = sbr.rel target = $region3
    $region8: #{tpu_custom_call.1} parent=1 // loop_exit
      _
    %1351 = vsyncpa [#allocation4], 1
    %s1352 = scalar_lea.sflag [#allocation4], 1
    %1353 = vsyncpa %s1352, 1

</llo_original>
